<compile_context>
chip_gen: v7x
topology: tpu7x:2x2x1
jax: 0.10.0
libtpu: 0.0.40
codegen_flags: <defaults>
</compile_context>

<pallas_src>
import functools

import jax
import jax.numpy as jnp
from jax.experimental import pallas as pl
from jax.experimental.pallas import tpu as pltpu


def _rmsnorm_f32(x_bf16, gamma_ref, eps):
    xf = x_bf16.astype(jnp.float32)
    var = jnp.mean(xf * xf, axis=-1, keepdims=True)
    inv = jax.lax.rsqrt(var + eps)
    g = gamma_ref[...].astype(jnp.float32)  # (1, H) broadcasts over rows
    return (xf * inv * g).astype(jnp.bfloat16)


def _mm(x_bf16, w_ref):
    # MXU matmul, f32 accumulation, cast back to module dtype (bf16) like the
    # FP8 Linear's output cast.
    y = jnp.dot(x_bf16, w_ref[...], preferred_element_type=jnp.float32)
    return y.astype(jnp.bfloat16)


def ub_kernel(x_ref, w0_ref, w1_ref, w2_ref, w3_ref, w4_ref,
              g0_ref, g1_ref, g2_ref, out_ref, *, eps):
    x = x_ref[...]                                   # [tile_t, H] bf16 (== `local`)
    # TODO(synk): per-tensor FP8 activation quantization (input_scale round-trip)
    # is not emulated inside the kernel; activations stay bf16.
    h1 = _mm(x, w0_ref) + x                          # l0 (ROW) + residual, bf16 add
    n0 = _rmsnorm_f32(h1, g0_ref, eps)               # norm0
    h4 = _mm(_mm(n0, w1_ref), w2_ref) + h1           # l1 (COLUMN) -> l2 (ROW) + res
    n1 = _rmsnorm_f32(h4, g1_ref, eps)               # norm1
    h7 = _mm(_mm(n1, w3_ref), w4_ref) + h4           # l3 (COLUMN) -> l4 (ROW) + res
    out_ref[...] = _rmsnorm_f32(h7, g2_ref, eps)     # norm2


def _round_up(x, m):
    return (x + m - 1) // m * m


def _choose_tile_t(T, cap=512, split_threshold=256):
    """Token tile:
       * T <= 256: single grid step with the full token extent (always legal).
       * T  > 256: a multiple-of-8 tile <= cap giving >= 2 grid steps (v7x 2-TC
         sharding); prefers an exact divisor of T, otherwise the wrapper pads."""
    if T <= split_threshold:
        return T
    target = min(cap, _round_up(pl.cdiv(T, 2), 8))
    for t in range(target, split_threshold - 1, -8):
        if T % t == 0:
            return t
    return target


def ub_forward(x, w0t, w1t, w2t, w3t, w4t, g0, g1, g2, *, eps, tile_t=None):
    T, H = x.shape
    if tile_t is None:
        tile_t = _choose_tile_t(T)
    grid_t = pl.cdiv(T, tile_t)
    T_pad = grid_t * tile_t

    x_in = x
    if T_pad != T:
        # Zero-pad the token axis: RMSNorm of an all-zero row is zero, and the
        # padded rows are sliced off below, so padding never leaks into outputs.
        x_in = jnp.pad(x, ((0, T_pad - T), (0, 0)))

    def _vmem_bytes(weight_bufs):
        w_bytes = 5 * H * H * 2 * weight_bufs                     # (H,H) bf16 slabs
        g_bytes = 3 * 8 * max(H, 128) * 2 * weight_bufs           # padded gamma rows
        io_bytes = 2 * tile_t * H * 2 * 2                         # x + out, 2-buffered
        scratch = 8 * tile_t * H * 4                              # temporaries headroom
        return w_bytes + g_bytes + io_bytes + scratch

    def _compiler_params(weight_bufs):
        kw = dict(dimension_semantics=("parallel",))
        need = 2 * _vmem_bytes(weight_bufs)                       # 2x safety margin
        if need > (16 << 20):                                     # smallest scoped default
            kw["vmem_limit_bytes"] = min(need, 64 << 20)          # never past v7x physical
        return pltpu.CompilerParams(**kw)

    kernel = functools.partial(ub_kernel, eps=eps)
    out_shape = jax.ShapeDtypeStruct((T_pad, H), jnp.bfloat16)
    x_spec = pl.BlockSpec((tile_t, H), lambda i: (i, 0))

    def _call(single_buffer_weights):
        if single_buffer_weights:
            # Weights / gammas are grid-invariant (index_map always (0, 0)); the
            # default 2-deep pipelining only duplicates them in VMEM.
            w_spec = pl.BlockSpec((H, H), lambda i: (0, 0),
                                  pipeline_mode=pl.Buffered(1))
            g_spec = pl.BlockSpec((1, H), lambda i: (0, 0),
                                  pipeline_mode=pl.Buffered(1))
            weight_bufs = 1
        else:
            w_spec = pl.BlockSpec((H, H), lambda i: (0, 0))
            g_spec = pl.BlockSpec((1, H), lambda i: (0, 0))
            weight_bufs = 2
        return pl.pallas_call(
            kernel,
            out_shape=out_shape,
            grid=(grid_t,),
            in_specs=[x_spec, w_spec, w_spec, w_spec, w_spec, w_spec,
                      g_spec, g_spec, g_spec],
            out_specs=x_spec,
            compiler_params=_compiler_params(weight_bufs),
        )(x_in, w0t, w1t, w2t, w3t, w4t, g0, g1, g2)

    try:
        out = _call(single_buffer_weights=True)
    except Exception:
        # Fallback keeps the kernel running if pipeline_mode / Buffered(1) is not
        # supported by the installed JAX version; only costs extra VMEM.
        out = _call(single_buffer_weights=False)

    if T_pad != T:
        out = out[:T]
    return out


def fp8_dequant_weight_T(w, weight_scale):
    """Emulate TRT-LLM FP8 weight load: quantize to e4m3 with per-tensor scale,
    dequantize, and transpose [out,in] -> [in,out] for the kernel layout."""
    wq = jnp.clip(w.astype(jnp.float32) / weight_scale, -448.0, 448.0)
    wq = wq.astype(jnp.float8_e4m3fn)
    w_dq = wq.astype(jnp.float32) * weight_scale
    return w_dq.T.astype(jnp.bfloat16)


if __name__ == "__main__":
    key = jax.random.PRNGKey(0)
    tp_size, rank = 1, 0            # single-device: chunk(input, 1)[0] == input
    num_tokens, hidden = 32, 128
    eps = 1e-5

    keys = jax.random.split(key, 10)
    x = (jax.random.normal(keys[0], (num_tokens, hidden), jnp.float32) * 0.5
         ).astype(jnp.bfloat16)

    weights = []
    for i in range(5):
        w = jax.random.normal(keys[1 + i], (hidden, hidden), jnp.float32) * 0.05
        w_scale = jnp.max(jnp.abs(w)) / 448.0          # per-tensor weight_scale
        weights.append(fp8_dequant_weight_T(w, w_scale))
    # input_scale values exist in the module API; activation quant not emulated.
    _input_scales = [jnp.float32(1.0)] * 5

    gammas = []
    for i in range(3):
        g = 1.0 + 0.1 * jax.random.normal(keys[6 + i], (hidden,), jnp.float32)
        gammas.append(g.astype(jnp.bfloat16).reshape(1, hidden))

    out = ub_forward(x, *weights, *gammas, eps=eps)
    jax.block_until_ready(out)
    assert out.shape == (num_tokens, hidden) and out.dtype == jnp.bfloat16
    assert bool(jnp.all(jnp.isfinite(out.astype(jnp.float32))))
    print("KERNEL_OK")
</pallas_src>

<mosaic_0001>
module attributes {stable_mosaic.version = 11 : i64} {
  func.func @ub_kernel(%arg0: i32, %arg1: memref<32x128xbf16, #tpu.memory_space<vmem>>, %arg2: memref<128x128xbf16, #tpu.memory_space<vmem>>, %arg3: memref<128x128xbf16, #tpu.memory_space<vmem>>, %arg4: memref<128x128xbf16, #tpu.memory_space<vmem>>, %arg5: memref<128x128xbf16, #tpu.memory_space<vmem>>, %arg6: memref<128x128xbf16, #tpu.memory_space<vmem>>, %arg7: memref<1x128xbf16, #tpu.memory_space<vmem>>, %arg8: memref<1x128xbf16, #tpu.memory_space<vmem>>, %arg9: memref<1x128xbf16, #tpu.memory_space<vmem>>, %arg10: memref<32x128xbf16, #tpu.memory_space<vmem>>) attributes {dimension_semantics = [#tpu.dimension_semantics<parallel>], iteration_bounds = array<i64: 1>, scalar_prefetch = 0 : i64, scratch_operands = 0 : i64, tpu.core_type = #tpu.core_type<tc>, window_params = [{transform_indices = @transform_0, window_bounds = array<i64: 32, 128>}, {pipeline_mode = #tpu.pipeline_mode<synchronous>, transform_indices = @transform_1, window_bounds = array<i64: 128, 128>}, {pipeline_mode = #tpu.pipeline_mode<synchronous>, transform_indices = @transform_2, window_bounds = array<i64: 128, 128>}, {pipeline_mode = #tpu.pipeline_mode<synchronous>, transform_indices = @transform_3, window_bounds = array<i64: 128, 128>}, {pipeline_mode = #tpu.pipeline_mode<synchronous>, transform_indices = @transform_4, window_bounds = array<i64: 128, 128>}, {pipeline_mode = #tpu.pipeline_mode<synchronous>, transform_indices = @transform_5, window_bounds = array<i64: 128, 128>}, {pipeline_mode = #tpu.pipeline_mode<synchronous>, transform_indices = @transform_6, window_bounds = array<i64: 1, 128>}, {pipeline_mode = #tpu.pipeline_mode<synchronous>, transform_indices = @transform_7, window_bounds = array<i64: 1, 128>}, {pipeline_mode = #tpu.pipeline_mode<synchronous>, transform_indices = @transform_8, window_bounds = array<i64: 1, 128>}, {transform_indices = @transform_9, window_bounds = array<i64: 32, 128>}]} {
    %c0 = arith.constant 0 : index
    %c0_0 = arith.constant 0 : index
    %0 = vector.load %arg1[%c0, %c0_0] : memref<32x128xbf16, #tpu.memory_space<vmem>>, vector<32x128xbf16>
    %c0_1 = arith.constant 0 : index
    %c0_2 = arith.constant 0 : index
    %1 = vector.load %arg2[%c0_1, %c0_2] : memref<128x128xbf16, #tpu.memory_space<vmem>>, vector<128x128xbf16>
    %cst = arith.constant dense<0.000000e+00> : vector<32x128xf32>
    %2 = tpu.matmul %0, %1, %cst {dimension_numbers = #tpu.dot_dimension_numbers<[1], [0], [0], [1], [0, 0, 1, 1], [], []>} : vector<32x128xbf16>, vector<128x128xbf16>, vector<32x128xf32> -> vector<32x128xf32>
    %3 = arith.truncf %2 : vector<32x128xf32> to vector<32x128xbf16>
    %4 = arith.addf %3, %0 : vector<32x128xbf16>
    %5 = arith.extf %4 : vector<32x128xbf16> to vector<32x128xf32>
    %6 = arith.mulf %5, %5 : vector<32x128xf32>
    %cst_3 = arith.constant dense<0.000000e+00> : vector<32xf32>
    %7 = vector.multi_reduction <add>, %6, %cst_3 [1] : vector<32x128xf32> to vector<32xf32>
    %8 = vector.shape_cast %7 : vector<32xf32> to vector<32x1xf32>
    %cst_4 = arith.constant 1.280000e+02 : f32
    %9 = vector.broadcast %cst_4 : f32 to vector<32x1xf32>
    %10 = arith.divf %8, %9 : vector<32x1xf32>
    %cst_5 = arith.constant 9.99999974E-6 : f32
    %11 = vector.broadcast %cst_5 : f32 to vector<32x1xf32>
    %12 = arith.addf %10, %11 : vector<32x1xf32>
    %13 = math.rsqrt %12 : vector<32x1xf32>
    %c0_6 = arith.constant 0 : index
    %c0_7 = arith.constant 0 : index
    %14 = vector.load %arg7[%c0_6, %c0_7] : memref<1x128xbf16, #tpu.memory_space<vmem>>, vector<1x128xbf16>
    %15 = arith.extf %14 : vector<1x128xbf16> to vector<1x128xf32>
    %16 = vector.broadcast %13 : vector<32x1xf32> to vector<32x128xf32>
    %17 = arith.mulf %5, %16 : vector<32x128xf32>
    %18 = vector.broadcast %15 : vector<1x128xf32> to vector<32x128xf32>
    %19 = arith.mulf %17, %18 : vector<32x128xf32>
    %20 = arith.truncf %19 : vector<32x128xf32> to vector<32x128xbf16>
    %c0_8 = arith.constant 0 : index
    %c0_9 = arith.constant 0 : index
    %21 = vector.load %arg3[%c0_8, %c0_9] : memref<128x128xbf16, #tpu.memory_space<vmem>>, vector<128x128xbf16>
    %cst_10 = arith.constant dense<0.000000e+00> : vector<32x128xf32>
    %22 = tpu.matmul %20, %21, %cst_10 {dimension_numbers = #tpu.dot_dimension_numbers<[1], [0], [0], [1], [0, 0, 1, 1], [], []>} : vector<32x128xbf16>, vector<128x128xbf16>, vector<32x128xf32> -> vector<32x128xf32>
    %23 = arith.truncf %22 : vector<32x128xf32> to vector<32x128xbf16>
    %c0_11 = arith.constant 0 : index
    %c0_12 = arith.constant 0 : index
    %24 = vector.load %arg4[%c0_11, %c0_12] : memref<128x128xbf16, #tpu.memory_space<vmem>>, vector<128x128xbf16>
    %cst_13 = arith.constant dense<0.000000e+00> : vector<32x128xf32>
    %25 = tpu.matmul %23, %24, %cst_13 {dimension_numbers = #tpu.dot_dimension_numbers<[1], [0], [0], [1], [0, 0, 1, 1], [], []>} : vector<32x128xbf16>, vector<128x128xbf16>, vector<32x128xf32> -> vector<32x128xf32>
    %26 = arith.truncf %25 : vector<32x128xf32> to vector<32x128xbf16>
    %27 = arith.addf %26, %4 : vector<32x128xbf16>
    %28 = arith.extf %27 : vector<32x128xbf16> to vector<32x128xf32>
    %29 = arith.mulf %28, %28 : vector<32x128xf32>
    %cst_14 = arith.constant dense<0.000000e+00> : vector<32xf32>
    %30 = vector.multi_reduction <add>, %29, %cst_14 [1] : vector<32x128xf32> to vector<32xf32>
    %31 = vector.shape_cast %30 : vector<32xf32> to vector<32x1xf32>
    %cst_15 = arith.constant 1.280000e+02 : f32
    %32 = vector.broadcast %cst_15 : f32 to vector<32x1xf32>
    %33 = arith.divf %31, %32 : vector<32x1xf32>
    %cst_16 = arith.constant 9.99999974E-6 : f32
    %34 = vector.broadcast %cst_16 : f32 to vector<32x1xf32>
    %35 = arith.addf %33, %34 : vector<32x1xf32>
    %36 = math.rsqrt %35 : vector<32x1xf32>
    %c0_17 = arith.constant 0 : index
    %c0_18 = arith.constant 0 : index
    %37 = vector.load %arg8[%c0_17, %c0_18] : memref<1x128xbf16, #tpu.memory_space<vmem>>, vector<1x128xbf16>
    %38 = arith.extf %37 : vector<1x128xbf16> to vector<1x128xf32>
    %39 = vector.broadcast %36 : vector<32x1xf32> to vector<32x128xf32>
    %40 = arith.mulf %28, %39 : vector<32x128xf32>
    %41 = vector.broadcast %38 : vector<1x128xf32> to vector<32x128xf32>
    %42 = arith.mulf %40, %41 : vector<32x128xf32>
    %43 = arith.truncf %42 : vector<32x128xf32> to vector<32x128xbf16>
    %c0_19 = arith.constant 0 : index
    %c0_20 = arith.constant 0 : index
    %44 = vector.load %arg5[%c0_19, %c0_20] : memref<128x128xbf16, #tpu.memory_space<vmem>>, vector<128x128xbf16>
    %cst_21 = arith.constant dense<0.000000e+00> : vector<32x128xf32>
    %45 = tpu.matmul %43, %44, %cst_21 {dimension_numbers = #tpu.dot_dimension_numbers<[1], [0], [0], [1], [0, 0, 1, 1], [], []>} : vector<32x128xbf16>, vector<128x128xbf16>, vector<32x128xf32> -> vector<32x128xf32>
    %46 = arith.truncf %45 : vector<32x128xf32> to vector<32x128xbf16>
    %c0_22 = arith.constant 0 : index
    %c0_23 = arith.constant 0 : index
    %47 = vector.load %arg6[%c0_22, %c0_23] : memref<128x128xbf16, #tpu.memory_space<vmem>>, vector<128x128xbf16>
    %cst_24 = arith.constant dense<0.000000e+00> : vector<32x128xf32>
    %48 = tpu.matmul %46, %47, %cst_24 {dimension_numbers = #tpu.dot_dimension_numbers<[1], [0], [0], [1], [0, 0, 1, 1], [], []>} : vector<32x128xbf16>, vector<128x128xbf16>, vector<32x128xf32> -> vector<32x128xf32>
    %49 = arith.truncf %48 : vector<32x128xf32> to vector<32x128xbf16>
    %50 = arith.addf %49, %27 : vector<32x128xbf16>
    %51 = arith.extf %50 : vector<32x128xbf16> to vector<32x128xf32>
    %52 = arith.mulf %51, %51 : vector<32x128xf32>
    %cst_25 = arith.constant dense<0.000000e+00> : vector<32xf32>
    %53 = vector.multi_reduction <add>, %52, %cst_25 [1] : vector<32x128xf32> to vector<32xf32>
    %54 = vector.shape_cast %53 : vector<32xf32> to vector<32x1xf32>
    %cst_26 = arith.constant 1.280000e+02 : f32
    %55 = vector.broadcast %cst_26 : f32 to vector<32x1xf32>
    %56 = arith.divf %54, %55 : vector<32x1xf32>
    %cst_27 = arith.constant 9.99999974E-6 : f32
    %57 = vector.broadcast %cst_27 : f32 to vector<32x1xf32>
    %58 = arith.addf %56, %57 : vector<32x1xf32>
    %59 = math.rsqrt %58 : vector<32x1xf32>
    %c0_28 = arith.constant 0 : index
    %c0_29 = arith.constant 0 : index
    %60 = vector.load %arg9[%c0_28, %c0_29] : memref<1x128xbf16, #tpu.memory_space<vmem>>, vector<1x128xbf16>
    %61 = arith.extf %60 : vector<1x128xbf16> to vector<1x128xf32>
    %62 = vector.broadcast %59 : vector<32x1xf32> to vector<32x128xf32>
    %63 = arith.mulf %51, %62 : vector<32x128xf32>
    %64 = vector.broadcast %61 : vector<1x128xf32> to vector<32x128xf32>
    %65 = arith.mulf %63, %64 : vector<32x128xf32>
    %66 = arith.truncf %65 : vector<32x128xf32> to vector<32x128xbf16>
    %c0_30 = arith.constant 0 : index
    %c0_31 = arith.constant 0 : index
    %67 = vector.load %arg10[%c0_30, %c0_31] : memref<32x128xbf16, #tpu.memory_space<vmem>>, vector<32x128xbf16>
    tpu.vector_store %arg10[%c0_30, %c0_31], %66 {strides = array<i32>} : memref<32x128xbf16, #tpu.memory_space<vmem>>, vector<32x128xbf16>,
    return
  }
  func.func @transform_0(%arg0: i32) -> (i32, i32) {
    %c0_i32 = arith.constant 0 : i32
    %c0_i32_0 = arith.constant 0 : i32
    return %arg0, %c0_i32 : i32, i32
  }
  func.func @transform_1(%arg0: i32) -> (i32, i32) {
    %c0_i32 = arith.constant 0 : i32
    %c0_i32_0 = arith.constant 0 : i32
    %c0_i32_1 = arith.constant 0 : i32
    return %c0_i32, %c0_i32_0 : i32, i32
  }
  func.func @transform_2(%arg0: i32) -> (i32, i32) {
    %c0_i32 = arith.constant 0 : i32
    %c0_i32_0 = arith.constant 0 : i32
    %c0_i32_1 = arith.constant 0 : i32
    return %c0_i32, %c0_i32_0 : i32, i32
  }
  func.func @transform_3(%arg0: i32) -> (i32, i32) {
    %c0_i32 = arith.constant 0 : i32
    %c0_i32_0 = arith.constant 0 : i32
    %c0_i32_1 = arith.constant 0 : i32
    return %c0_i32, %c0_i32_0 : i32, i32
  }
  func.func @transform_4(%arg0: i32) -> (i32, i32) {
    %c0_i32 = arith.constant 0 : i32
    %c0_i32_0 = arith.constant 0 : i32
    %c0_i32_1 = arith.constant 0 : i32
    return %c0_i32, %c0_i32_0 : i32, i32
  }
  func.func @transform_5(%arg0: i32) -> (i32, i32) {
    %c0_i32 = arith.constant 0 : i32
    %c0_i32_0 = arith.constant 0 : i32
    %c0_i32_1 = arith.constant 0 : i32
    return %c0_i32, %c0_i32_0 : i32, i32
  }
  func.func @transform_6(%arg0: i32) -> (i32, i32) {
    %c0_i32 = arith.constant 0 : i32
    %c0_i32_0 = arith.constant 0 : i32
    %c0_i32_1 = arith.constant 0 : i32
    return %c0_i32, %c0_i32_0 : i32, i32
  }
  func.func @transform_7(%arg0: i32) -> (i32, i32) {
    %c0_i32 = arith.constant 0 : i32
    %c0_i32_0 = arith.constant 0 : i32
    %c0_i32_1 = arith.constant 0 : i32
    return %c0_i32, %c0_i32_0 : i32, i32
  }
  func.func @transform_8(%arg0: i32) -> (i32, i32) {
    %c0_i32 = arith.constant 0 : i32
    %c0_i32_0 = arith.constant 0 : i32
    %c0_i32_1 = arith.constant 0 : i32
    return %c0_i32, %c0_i32_0 : i32, i32
  }
  func.func @transform_9(%arg0: i32) -> (i32, i32) {
    %c0_i32 = arith.constant 0 : i32
    %c0_i32_0 = arith.constant 0 : i32
    return %arg0, %c0_i32 : i32, i32
  }
}

module attributes {stable_mosaic.version = 11 : i64} {
  func.func @ub_kernel(%arg0: i32, %arg1: memref<32x128xbf16, #tpu.memory_space<vmem>>, %arg2: memref<128x128xbf16, #tpu.memory_space<vmem>>, %arg3: memref<128x128xbf16, #tpu.memory_space<vmem>>, %arg4: memref<128x128xbf16, #tpu.memory_space<vmem>>, %arg5: memref<128x128xbf16, #tpu.memory_space<vmem>>, %arg6: memref<128x128xbf16, #tpu.memory_space<vmem>>, %arg7: memref<1x128xbf16, #tpu.memory_space<vmem>>, %arg8: memref<1x128xbf16, #tpu.memory_space<vmem>>, %arg9: memref<1x128xbf16, #tpu.memory_space<vmem>>, %arg10: memref<32x128xbf16, #tpu.memory_space<vmem>>) attributes {dimension_semantics = [#tpu.dimension_semantics<parallel>], iteration_bounds = array<i64: 1>, scalar_prefetch = 0 : i64, scratch_operands = 0 : i64, tpu.core_type = #tpu.core_type<tc>, window_params = [{transform_indices = @transform_0, window_bounds = array<i64: 32, 128>}, {pipeline_mode = #tpu.pipeline_mode<synchronous>, transform_indices = @transform_1, window_bounds = array<i64: 128, 128>}, {pipeline_mode = #tpu.pipeline_mode<synchronous>, transform_indices = @transform_2, window_bounds = array<i64: 128, 128>}, {pipeline_mode = #tpu.pipeline_mode<synchronous>, transform_indices = @transform_3, window_bounds = array<i64: 128, 128>}, {pipeline_mode = #tpu.pipeline_mode<synchronous>, transform_indices = @transform_4, window_bounds = array<i64: 128, 128>}, {pipeline_mode = #tpu.pipeline_mode<synchronous>, transform_indices = @transform_5, window_bounds = array<i64: 128, 128>}, {pipeline_mode = #tpu.pipeline_mode<synchronous>, transform_indices = @transform_6, window_bounds = array<i64: 1, 128>}, {pipeline_mode = #tpu.pipeline_mode<synchronous>, transform_indices = @transform_7, window_bounds = array<i64: 1, 128>}, {pipeline_mode = #tpu.pipeline_mode<synchronous>, transform_indices = @transform_8, window_bounds = array<i64: 1, 128>}, {transform_indices = @transform_9, window_bounds = array<i64: 32, 128>}]} {
    %c0 = arith.constant 0 : index
    %c0_0 = arith.constant 0 : index
    %0 = vector.load %arg1[%c0, %c0_0] : memref<32x128xbf16, #tpu.memory_space<vmem>>, vector<32x128xbf16>
    %c0_1 = arith.constant 0 : index
    %c0_2 = arith.constant 0 : index
    %1 = vector.load %arg2[%c0_1, %c0_2] : memref<128x128xbf16, #tpu.memory_space<vmem>>, vector<128x128xbf16>
    %cst = arith.constant dense<0.000000e+00> : vector<32x128xf32>
    %2 = tpu.matmul %0, %1, %cst {dimension_numbers = #tpu.dot_dimension_numbers<[1], [0], [0], [1], [0, 0, 1, 1], [], []>} : vector<32x128xbf16>, vector<128x128xbf16>, vector<32x128xf32> -> vector<32x128xf32>
    %3 = arith.truncf %2 : vector<32x128xf32> to vector<32x128xbf16>
    %4 = arith.addf %3, %0 : vector<32x128xbf16>
    %5 = arith.extf %4 : vector<32x128xbf16> to vector<32x128xf32>
    %6 = arith.mulf %5, %5 : vector<32x128xf32>
    %cst_3 = arith.constant dense<0.000000e+00> : vector<32xf32>
    %7 = vector.multi_reduction <add>, %6, %cst_3 [1] : vector<32x128xf32> to vector<32xf32>
    %8 = vector.shape_cast %7 : vector<32xf32> to vector<32x1xf32>
    %cst_4 = arith.constant 1.280000e+02 : f32
    %9 = vector.broadcast %cst_4 : f32 to vector<32x1xf32>
    %10 = arith.divf %8, %9 : vector<32x1xf32>
    %cst_5 = arith.constant 9.99999974E-6 : f32
    %11 = vector.broadcast %cst_5 : f32 to vector<32x1xf32>
    %12 = arith.addf %10, %11 : vector<32x1xf32>
    %13 = math.rsqrt %12 : vector<32x1xf32>
    %c0_6 = arith.constant 0 : index
    %c0_7 = arith.constant 0 : index
    %14 = vector.load %arg7[%c0_6, %c0_7] : memref<1x128xbf16, #tpu.memory_space<vmem>>, vector<1x128xbf16>
    %15 = arith.extf %14 : vector<1x128xbf16> to vector<1x128xf32>
    %16 = vector.broadcast %13 : vector<32x1xf32> to vector<32x128xf32>
    %17 = arith.mulf %5, %16 : vector<32x128xf32>
    %18 = vector.broadcast %15 : vector<1x128xf32> to vector<32x128xf32>
    %19 = arith.mulf %17, %18 : vector<32x128xf32>
    %20 = arith.truncf %19 : vector<32x128xf32> to vector<32x128xbf16>
    %c0_8 = arith.constant 0 : index
    %c0_9 = arith.constant 0 : index
    %21 = vector.load %arg3[%c0_8, %c0_9] : memref<128x128xbf16, #tpu.memory_space<vmem>>, vector<128x128xbf16>
    %cst_10 = arith.constant dense<0.000000e+00> : vector<32x128xf32>
    %22 = tpu.matmul %20, %21, %cst_10 {dimension_numbers = #tpu.dot_dimension_numbers<[1], [0], [0], [1], [0, 0, 1, 1], [], []>} : vector<32x128xbf16>, vector<128x128xbf16>, vector<32x128xf32> -> vector<32x128xf32>
    %23 = arith.truncf %22 : vector<32x128xf32> to vector<32x128xbf16>
    %c0_11 = arith.constant 0 : index
    %c0_12 = arith.constant 0 : index
    %24 = vector.load %arg4[%c0_11, %c0_12] : memref<128x128xbf16, #tpu.memory_space<vmem>>, vector<128x128xbf16>
    %cst_13 = arith.constant dense<0.000000e+00> : vector<32x128xf32>
    %25 = tpu.matmul %23, %24, %cst_13 {dimension_numbers = #tpu.dot_dimension_numbers<[1], [0], [0], [1], [0, 0, 1, 1], [], []>} : vector<32x128xbf16>, vector<128x128xbf16>, vector<32x128xf32> -> vector<32x128xf32>
    %26 = arith.truncf %25 : vector<32x128xf32> to vector<32x128xbf16>
    %27 = arith.addf %26, %4 : vector<32x128xbf16>
    %28 = arith.extf %27 : vector<32x128xbf16> to vector<32x128xf32>
    %29 = arith.mulf %28, %28 : vector<32x128xf32>
    %cst_14 = arith.constant dense<0.000000e+00> : vector<32xf32>
    %30 = vector.multi_reduction <add>, %29, %cst_14 [1] : vector<32x128xf32> to vector<32xf32>
    %31 = vector.shape_cast %30 : vector<32xf32> to vector<32x1xf32>
    %cst_15 = arith.constant 1.280000e+02 : f32
    %32 = vector.broadcast %cst_15 : f32 to vector<32x1xf32>
    %33 = arith.divf %31, %32 : vector<32x1xf32>
    %cst_16 = arith.constant 9.99999974E-6 : f32
    %34 = vector.broadcast %cst_16 : f32 to vector<32x1xf32>
    %35 = arith.addf %33, %34 : vector<32x1xf32>
    %36 = math.rsqrt %35 : vector<32x1xf32>
    %c0_17 = arith.constant 0 : index
    %c0_18 = arith.constant 0 : index
    %37 = vector.load %arg8[%c0_17, %c0_18] : memref<1x128xbf16, #tpu.memory_space<vmem>>, vector<1x128xbf16>
    %38 = arith.extf %37 : vector<1x128xbf16> to vector<1x128xf32>
    %39 = vector.broadcast %36 : vector<32x1xf32> to vector<32x128xf32>
    %40 = arith.mulf %28, %39 : vector<32x128xf32>
    %41 = vector.broadcast %38 : vector<1x128xf32> to vector<32x128xf32>
    %42 = arith.mulf %40, %41 : vector<32x128xf32>
    %43 = arith.truncf %42 : vector<32x128xf32> to vector<32x128xbf16>
    %c0_19 = arith.constant 0 : index
    %c0_20 = arith.constant 0 : index
    %44 = vector.load %arg5[%c0_19, %c0_20] : memref<128x128xbf16, #tpu.memory_space<vmem>>, vector<128x128xbf16>
    %cst_21 = arith.constant dense<0.000000e+00> : vector<32x128xf32>
    %45 = tpu.matmul %43, %44, %cst_21 {dimension_numbers = #tpu.dot_dimension_numbers<[1], [0], [0], [1], [0, 0, 1, 1], [], []>} : vector<32x128xbf16>, vector<128x128xbf16>, vector<32x128xf32> -> vector<32x128xf32>
    %46 = arith.truncf %45 : vector<32x128xf32> to vector<32x128xbf16>
    %c0_22 = arith.constant 0 : index
    %c0_23 = arith.constant 0 : index
    %47 = vector.load %arg6[%c0_22, %c0_23] : memref<128x128xbf16, #tpu.memory_space<vmem>>, vector<128x128xbf16>
    %cst_24 = arith.constant dense<0.000000e+00> : vector<32x128xf32>
    %48 = tpu.matmul %46, %47, %cst_24 {dimension_numbers = #tpu.dot_dimension_numbers<[1], [0], [0], [1], [0, 0, 1, 1], [], []>} : vector<32x128xbf16>, vector<128x128xbf16>, vector<32x128xf32> -> vector<32x128xf32>
    %49 = arith.truncf %48 : vector<32x128xf32> to vector<32x128xbf16>
    %50 = arith.addf %49, %27 : vector<32x128xbf16>
    %51 = arith.extf %50 : vector<32x128xbf16> to vector<32x128xf32>
    %52 = arith.mulf %51, %51 : vector<32x128xf32>
    %cst_25 = arith.constant dense<0.000000e+00> : vector<32xf32>
    %53 = vector.multi_reduction <add>, %52, %cst_25 [1] : vector<32x128xf32> to vector<32xf32>
    %54 = vector.shape_cast %53 : vector<32xf32> to vector<32x1xf32>
    %cst_26 = arith.constant 1.280000e+02 : f32
    %55 = vector.broadcast %cst_26 : f32 to vector<32x1xf32>
    %56 = arith.divf %54, %55 : vector<32x1xf32>
    %cst_27 = arith.constant 9.99999974E-6 : f32
    %57 = vector.broadcast %cst_27 : f32 to vector<32x1xf32>
    %58 = arith.addf %56, %57 : vector<32x1xf32>
    %59 = math.rsqrt %58 : vector<32x1xf32>
    %c0_28 = arith.constant 0 : index
    %c0_29 = arith.constant 0 : index
    %60 = vector.load %arg9[%c0_28, %c0_29] : memref<1x128xbf16, #tpu.memory_space<vmem>>, vector<1x128xbf16>
    %61 = arith.extf %60 : vector<1x128xbf16> to vector<1x128xf32>
    %62 = vector.broadcast %59 : vector<32x1xf32> to vector<32x128xf32>
    %63 = arith.mulf %51, %62 : vector<32x128xf32>
    %64 = vector.broadcast %61 : vector<1x128xf32> to vector<32x128xf32>
    %65 = arith.mulf %63, %64 : vector<32x128xf32>
    %66 = arith.truncf %65 : vector<32x128xf32> to vector<32x128xbf16>
    %c0_30 = arith.constant 0 : index
    %c0_31 = arith.constant 0 : index
    %67 = vector.load %arg10[%c0_30, %c0_31] : memref<32x128xbf16, #tpu.memory_space<vmem>>, vector<32x128xbf16>
    tpu.vector_store %arg10[%c0_30, %c0_31], %66 {strides = array<i32>} : memref<32x128xbf16, #tpu.memory_space<vmem>>, vector<32x128xbf16>,
    return
  }
  func.func @transform_0(%arg0: i32) -> (i32, i32) {
    %c0_i32 = arith.constant 0 : i32
    %c0_i32_0 = arith.constant 0 : i32
    return %arg0, %c0_i32 : i32, i32
  }
  func.func @transform_1(%arg0: i32) -> (i32, i32) {
    %c0_i32 = arith.constant 0 : i32
    %c0_i32_0 = arith.constant 0 : i32
    %c0_i32_1 = arith.constant 0 : i32
    return %c0_i32, %c0_i32_0 : i32, i32
  }
  func.func @transform_2(%arg0: i32) -> (i32, i32) {
    %c0_i32 = arith.constant 0 : i32
    %c0_i32_0 = arith.constant 0 : i32
    %c0_i32_1 = arith.constant 0 : i32
    return %c0_i32, %c0_i32_0 : i32, i32
  }
  func.func @transform_3(%arg0: i32) -> (i32, i32) {
    %c0_i32 = arith.constant 0 : i32
    %c0_i32_0 = arith.constant 0 : i32
    %c0_i32_1 = arith.constant 0 : i32
    return %c0_i32, %c0_i32_0 : i32, i32
  }
  func.func @transform_4(%arg0: i32) -> (i32, i32) {
    %c0_i32 = arith.constant 0 : i32
    %c0_i32_0 = arith.constant 0 : i32
    %c0_i32_1 = arith.constant 0 : i32
    return %c0_i32, %c0_i32_0 : i32, i32
  }
  func.func @transform_5(%arg0: i32) -> (i32, i32) {
    %c0_i32 = arith.constant 0 : i32
    %c0_i32_0 = arith.constant 0 : i32
    %c0_i32_1 = arith.constant 0 : i32
    return %c0_i32, %c0_i32_0 : i32, i32
  }
  func.func @transform_6(%arg0: i32) -> (i32, i32) {
    %c0_i32 = arith.constant 0 : i32
    %c0_i32_0 = arith.constant 0 : i32
    %c0_i32_1 = arith.constant 0 : i32
    return %c0_i32, %c0_i32_0 : i32, i32
  }
  func.func @transform_7(%arg0: i32) -> (i32, i32) {
    %c0_i32 = arith.constant 0 : i32
    %c0_i32_0 = arith.constant 0 : i32
    %c0_i32_1 = arith.constant 0 : i32
    return %c0_i32, %c0_i32_0 : i32, i32
  }
  func.func @transform_8(%arg0: i32) -> (i32, i32) {
    %c0_i32 = arith.constant 0 : i32
    %c0_i32_0 = arith.constant 0 : i32
    %c0_i32_1 = arith.constant 0 : i32
    return %c0_i32, %c0_i32_0 : i32, i32
  }
  func.func @transform_9(%arg0: i32) -> (i32, i32) {
    %c0_i32 = arith.constant 0 : i32
    %c0_i32_0 = arith.constant 0 : i32
    return %arg0, %c0_i32 : i32, i32
  }
}

</mosaic_0001>

<llo_original>
// kernel: tpu_custom_call.1
$region0: #{tpu_custom_call.1}
  #allocation0 [shape = 'u32[]', space=smem, size = 0x4, offset = 0x4, fixed_abs, tag = 'smem constant byte address 0x4 - core index']
  #allocation1 [shape = 'u32[144,128]{1,0:T(1,128)}', space=vmem, size = 0x12000, scoped, tag = 'internal scratch']
  %s0 = inlined_call_operand.hbm [shape: bf16[32,128], index: 0, kind: input, shape index: {}]
  %s1 = inlined_call_operand.hbm [shape: bf16[128,128], index: 1, kind: input, shape index: {}]
  %s2 = inlined_call_operand.hbm [shape: bf16[128,128], index: 2, kind: input, shape index: {}]
  %s3 = inlined_call_operand.hbm [shape: bf16[128,128], index: 3, kind: input, shape index: {}]
  %s4 = inlined_call_operand.hbm [shape: bf16[128,128], index: 4, kind: input, shape index: {}]
  %s5 = inlined_call_operand.hbm [shape: bf16[128,128], index: 5, kind: input, shape index: {}]
  %s6 = inlined_call_operand.vmem [shape: bf16[1,128], index: 6, kind: input, shape index: {}]
  %s7 = inlined_call_operand.vmem [shape: bf16[1,128], index: 7, kind: input, shape index: {}]
  %s8 = inlined_call_operand.vmem [shape: bf16[1,128], index: 8, kind: input, shape index: {}]
  %s9 = inlined_call_operand.hbm [shape: bf16[32,128], index: 9, kind: output, shape index: {}]
  %s10 = sld [smem:[#allocation0]]
  $region70: #{tpu_custom_call.1} parent=0
    _
  %s12 = ssub.s32 1, %s10
  %s13 = scalar_select 0, %s12, %s10
  $region1: #{tpu_custom_call.1} parent=0
    #allocation2 [shape = 'u8[8192]{0}', space=vmem, size = 0x2000, scoped, tag = 'input window, operand 0, single buffered']
    #allocation3 [shape = 's32[1]{0}', space=sflag, size = 0x4, scoped, tag = 'scoped memory for tpu_custom_call.1']
    #allocation4 [shape = 's32[1]{0}', space=sflag, size = 0x4, scoped, tag = 'scoped memory for tpu_custom_call.1']
    #allocation5 [shape = 'u8[32768]{0}', space=vmem, size = 0x8000, scoped, tag = 'input window, operand 1, single buffered']
    #allocation6 [shape = 's32[1]{0}', space=sflag, size = 0x4, scoped, tag = 'scoped memory for tpu_custom_call.1']
    #allocation7 [shape = 'u8[32768]{0}', space=vmem, size = 0x8000, scoped, tag = 'input window, operand 2, single buffered']
    #allocation8 [shape = 'u8[32768]{0}', space=vmem, size = 0x8000, scoped, tag = 'input window, operand 3, single buffered']
    #allocation9 [shape = 's32[1]{0}', space=sflag, size = 0x4, scoped, tag = 'scoped memory for tpu_custom_call.1']
    #allocation10 [shape = 'u8[32768]{0}', space=vmem, size = 0x8000, scoped, tag = 'input window, operand 4, single buffered']
    #allocation11 [shape = 'u8[32768]{0}', space=vmem, size = 0x8000, scoped, tag = 'input window, operand 5, single buffered']
    #allocation12 [shape = 's32[1]{0}', space=sflag, size = 0x4, scoped, tag = 'scoped memory for tpu_custom_call.1']
    #allocation13 [shape = 'u8[8192]{0}', space=vmem, size = 0x2000, scoped, tag = 'output window, operand 0, single buffered']
    %14 = vsyncpa [#allocation3], 0
    %15 = vsyncpa [#allocation6], 0
    %16 = vsyncpa [#allocation9], 0
    %17 = vsyncpa [#allocation12], 0
    %18 = vsyncpa [#allocation4], 0
    // Predicated region
    $region2: #{tpu_custom_call.1} parent=1 // pred_check
      _
    $region3: #{tpu_custom_call.1} parent=1 // pred_check_branch
      %20 = sbr.rel (0) target = $region5
    $region4: #{tpu_custom_call.1} parent=1 // pred_region
      %s22 = ssub.s32 256, 256
      %23 = vsyncadd [#allocation3], %s22
      %s24 = sshll.u32 [#allocation2], 4
      %s25 = int_to_ptr.vmem [resolvable:$true] %s24
      %30 = dma.hbm_to_vmem [thread:$0]  %s0, 256, %s25, [#allocation3], 64, 64, 4
    $region5: #{tpu_custom_call.1} parent=1 // pred_fallthru
      _
    // Predicated region
    $region6: #{tpu_custom_call.1} parent=1 // pred_check
      _
    $region7: #{tpu_custom_call.1} parent=1 // pred_check_branch
      %32 = sbr.rel (0) target = $region9
    $region8: #{tpu_custom_call.1} parent=1 // pred_region
      %s34 = ssub.s32 1024, 1024
      %35 = vsyncadd [#allocation6], %s34
      %s36 = sshll.u32 [#allocation5], 4
      %s37 = int_to_ptr.vmem [resolvable:$true] %s36
      %42 = dma.hbm_to_vmem [thread:$0]  %s1, 1024, %s37, [#allocation6], 64, 64, 4
    $region9: #{tpu_custom_call.1} parent=1 // pred_fallthru
      _
    // Predicated region
    $region10: #{tpu_custom_call.1} parent=1 // pred_check
      _
    $region11: #{tpu_custom_call.1} parent=1 // pred_check_branch
      %44 = sbr.rel (0) target = $region13
    $region12: #{tpu_custom_call.1} parent=1 // pred_region
      %s46 = ssub.s32 1024, 1024
      %47 = vsyncadd [#allocation6], %s46
      %s48 = sshll.u32 [#allocation7], 4
      %s49 = int_to_ptr.vmem [resolvable:$true] %s48
      %54 = dma.hbm_to_vmem [thread:$0]  %s2, 1024, %s49, [#allocation6], 64, 64, 4
    $region13: #{tpu_custom_call.1} parent=1 // pred_fallthru
      _
    // Predicated region
    $region14: #{tpu_custom_call.1} parent=1 // pred_check
      _
    $region15: #{tpu_custom_call.1} parent=1 // pred_check_branch
      %56 = sbr.rel (0) target = $region17
    $region16: #{tpu_custom_call.1} parent=1 // pred_region
      %s58 = ssub.s32 1024, 1024
      %59 = vsyncadd [#allocation9], %s58
      %s60 = sshll.u32 [#allocation8], 4
      %s61 = int_to_ptr.vmem [resolvable:$true] %s60
      %66 = dma.hbm_to_vmem [thread:$0]  %s3, 1024, %s61, [#allocation9], 64, 64, 4
    $region17: #{tpu_custom_call.1} parent=1 // pred_fallthru
      _
    // Predicated region
    $region18: #{tpu_custom_call.1} parent=1 // pred_check
      _
    $region19: #{tpu_custom_call.1} parent=1 // pred_check_branch
      %68 = sbr.rel (0) target = $region21
    $region20: #{tpu_custom_call.1} parent=1 // pred_region
      %s70 = ssub.s32 1024, 1024
      %71 = vsyncadd [#allocation9], %s70
      %s72 = sshll.u32 [#allocation10], 4
      %s73 = int_to_ptr.vmem [resolvable:$true] %s72
      %78 = dma.hbm_to_vmem [thread:$0]  %s4, 1024, %s73, [#allocation9], 64, 64, 4
    $region21: #{tpu_custom_call.1} parent=1 // pred_fallthru
      _
    // Predicated region
    $region22: #{tpu_custom_call.1} parent=1 // pred_check
      _
    $region23: #{tpu_custom_call.1} parent=1 // pred_check_branch
      %80 = sbr.rel (0) target = $region25
    $region24: #{tpu_custom_call.1} parent=1 // pred_region
      %s82 = ssub.s32 1024, 1024
      %83 = vsyncadd [#allocation12], %s82
      %s84 = sshll.u32 [#allocation11], 4
      %s85 = int_to_ptr.vmem [resolvable:$true] %s84
      %90 = dma.hbm_to_vmem [thread:$0]  %s5, 1024, %s85, [#allocation12], 64, 64, 4
    $region25: #{tpu_custom_call.1} parent=1 // pred_fallthru
      _
    // Predicated region
    $region26: #{tpu_custom_call.1} parent=1 // pred_check
      _
    $region27: #{tpu_custom_call.1} parent=1 // pred_check_branch
      %92 = sbr.rel (0) target = $region29
    $region28: #{tpu_custom_call.1} parent=1 // pred_region
      _
    $region29: #{tpu_custom_call.1} parent=1 // pred_fallthru
      _
    // Predicated region
    $region30: #{tpu_custom_call.1} parent=1 // pred_check
      _
    $region31: #{tpu_custom_call.1} parent=1 // pred_check_branch
      %94 = sbr.rel (0) target = $region33
    $region32: #{tpu_custom_call.1} parent=1 // pred_region
      _
    $region33: #{tpu_custom_call.1} parent=1 // pred_fallthru
      _
    // Predicated region
    $region34: #{tpu_custom_call.1} parent=1 // pred_check
      _
    $region35: #{tpu_custom_call.1} parent=1 // pred_check_branch
      %96 = sbr.rel (0) target = $region37
    $region36: #{tpu_custom_call.1} parent=1 // pred_region
      _
    $region37: #{tpu_custom_call.1} parent=1 // pred_fallthru
      _
    // Predicated region
    $region38: #{tpu_custom_call.1} parent=1 // pred_check
      _
    $region39: #{tpu_custom_call.1} parent=1 // pred_check_branch
      %98 = sbr.rel (0) target = $region41
    $region40: #{tpu_custom_call.1} parent=1 // pred_region
      %99 = dma.done [#allocation3], 256
    $region41: #{tpu_custom_call.1} parent=1 // pred_fallthru
      _
    // Predicated region
    $region42: #{tpu_custom_call.1} parent=1 // pred_check
      _
    $region43: #{tpu_custom_call.1} parent=1 // pred_check_branch
      %101 = sbr.rel (0) target = $region45
    $region44: #{tpu_custom_call.1} parent=1 // pred_region
      %102 = dma.done [#allocation6], 1024
    $region45: #{tpu_custom_call.1} parent=1 // pred_fallthru
      _
    // Predicated region
    $region46: #{tpu_custom_call.1} parent=1 // pred_check
      _
    $region47: #{tpu_custom_call.1} parent=1 // pred_check_branch
      %104 = sbr.rel (0) target = $region49
    $region48: #{tpu_custom_call.1} parent=1 // pred_region
      %105 = dma.done [#allocation6], 1024
    $region49: #{tpu_custom_call.1} parent=1 // pred_fallthru
      _
    // Predicated region
    $region50: #{tpu_custom_call.1} parent=1 // pred_check
      _
    $region51: #{tpu_custom_call.1} parent=1 // pred_check_branch
      %107 = sbr.rel (0) target = $region53
    $region52: #{tpu_custom_call.1} parent=1 // pred_region
      %108 = dma.done [#allocation9], 1024
    $region53: #{tpu_custom_call.1} parent=1 // pred_fallthru
      _
    // Predicated region
    $region54: #{tpu_custom_call.1} parent=1 // pred_check
      _
    $region55: #{tpu_custom_call.1} parent=1 // pred_check_branch
      %110 = sbr.rel (0) target = $region57
    $region56: #{tpu_custom_call.1} parent=1 // pred_region
      %111 = dma.done [#allocation9], 1024
    $region57: #{tpu_custom_call.1} parent=1 // pred_fallthru
      _
    // Predicated region
    $region58: #{tpu_custom_call.1} parent=1 // pred_check
      _
    $region59: #{tpu_custom_call.1} parent=1 // pred_check_branch
      %113 = sbr.rel (0) target = $region61
    $region60: #{tpu_custom_call.1} parent=1 // pred_region
      %114 = dma.done [#allocation12], 1024
    $region61: #{tpu_custom_call.1} parent=1 // pred_fallthru
      _
    %v116 = vld [vmem:[#allocation2] sm:$0xf]
    %v117 = vld [vmem:[#allocation2 + $0x4] sm:$0xf]
    %v118 = vld [vmem:[#allocation2 + $0x8] sm:$0xf]
    %v119 = vld [vmem:[#allocation2 + $0xc] sm:$0xf]
    %v120 = vld [vmem:[#allocation5] sm:$0xf]
    %v121 = vld [vmem:[#allocation5 + $0x4] sm:$0xf]
    %v122 = vld [vmem:[#allocation5 + $0x8] sm:$0xf]
    %v123 = vld [vmem:[#allocation5 + $0xc] sm:$0xf]
    %v124 = vld [vmem:[#allocation5 + $0x10] sm:$0xf]
    %v125 = vld [vmem:[#allocation5 + $0x14] sm:$0xf]
    %v126 = vld [vmem:[#allocation5 + $0x18] sm:$0xf]
    %v127 = vld [vmem:[#allocation5 + $0x1c] sm:$0xf]
    %v128 = vld [vmem:[#allocation5 + $0x20] sm:$0xf]
    %v129 = vld [vmem:[#allocation5 + $0x24] sm:$0xf]
    %v130 = vld [vmem:[#allocation5 + $0x28] sm:$0xf]
    %v131 = vld [vmem:[#allocation5 + $0x2c] sm:$0xf]
    %v132 = vld [vmem:[#allocation5 + $0x30] sm:$0xf]
    %v133 = vld [vmem:[#allocation5 + $0x34] sm:$0xf]
    %v134 = vld [vmem:[#allocation5 + $0x38] sm:$0xf]
    %v135 = vld [vmem:[#allocation5 + $0x3c] sm:$0xf]
    %v140 = vunpack.c.l.b16 %v116
    %v141 = vunpack.c.l.b16 %v117
    %v142 = vunpack.c.l.b16 %v118
    %v143 = vunpack.c.l.b16 %v119
    %v144 = vpack.c.b16 %v141, %v140
    %v145 = vpack.c.b16 %v143, %v142
    %v164 = vunpack.c.l.b16 %v120
    %v165 = vunpack.c.l.b16 %v121
    %v166 = vunpack.c.l.b16 %v122
    %v167 = vunpack.c.l.b16 %v123
    %v168 = vunpack.c.l.b16 %v124
    %v169 = vunpack.c.l.b16 %v125
    %v170 = vunpack.c.l.b16 %v126
    %v171 = vunpack.c.l.b16 %v127
    %v172 = vunpack.c.l.b16 %v128
    %v173 = vunpack.c.l.b16 %v129
    %v174 = vunpack.c.l.b16 %v130
    %v175 = vunpack.c.l.b16 %v131
    %v176 = vunpack.c.l.b16 %v132
    %v177 = vunpack.c.l.b16 %v133
    %v178 = vunpack.c.l.b16 %v134
    %v179 = vunpack.c.l.b16 %v135
    %v180 = vpack.c.b16 %v165, %v164
    %v181 = vpack.c.b16 %v167, %v166
    %v182 = vpack.c.b16 %v169, %v168
    %v183 = vpack.c.b16 %v171, %v170
    %v184 = vpack.c.b16 %v173, %v172
    %v185 = vpack.c.b16 %v175, %v174
    %v186 = vpack.c.b16 %v177, %v176
    %v187 = vpack.c.b16 %v179, %v178
    %196 = vmatprep.subr.bf16.mxu0 0
    %197 = vmatpush1.bf16.msra.mxu0 %v180
    %198 = vmatprep.subr.bf16.mxu0 0
    %199 = vmatpush1.bf16.msra.mxu0 %v181
    %200 = vmatprep.subr.bf16.mxu0 0
    %201 = vmatpush1.bf16.msra.mxu0 %v182
    %202 = vmatprep.subr.bf16.mxu0 0
    %203 = vmatpush1.bf16.msra.mxu0 %v183
    %204 = vmatprep.subr.bf16.mxu0 0
    %205 = vmatpush1.bf16.msra.mxu0 %v184
    %206 = vmatprep.subr.bf16.mxu0 0
    %207 = vmatpush1.bf16.msra.mxu0 %v185
    %208 = vmatprep.subr.bf16.mxu0 0
    %209 = vmatpush1.bf16.msra.mxu0 %v186
    %210 = vmatprep.subr.bf16.mxu0 0
    %211 = vmatpush1.bf16.msra.mxu0 %v187
    %212 = vmatprep.subr.bf16.mxu0 0
    %213 = vmatpush1.bf16.msra.mxu0 0
    %214 = vmatprep.subr.bf16.mxu0 0
    %215 = vmatpush1.bf16.msra.mxu0 0
    %216 = vmatprep.subr.bf16.mxu0 0
    %217 = vmatpush1.bf16.msra.mxu0 0
    %218 = vmatprep.subr.bf16.mxu0 0
    %219 = vmatpush1.bf16.msra.mxu0 0
    %220 = vmatprep.subr.bf16.mxu0 0
    %221 = vmatpush1.bf16.msra.mxu0 0
    %222 = vmatprep.subr.bf16.mxu0 0
    %223 = vmatpush1.bf16.msra.mxu0 0
    %224 = vmatprep.subr.bf16.mxu0 0
    %225 = vmatpush1.bf16.msra.mxu0 0
    %226 = vmatprep.subr.bf16.mxu0 0
    %227 = vmatpush1.bf16.msra.mxu0 0
    %228 = vmatprep.mubr.bf16.mxu0 0
    %229 = vmatmul.mubr.bf16.gmra.mrb[0].mxu0 %v144
    %v230 = vpop.f32.mrb[0].mxu0
    %v231 = vadd.f32 0.0, %v230
    %v232 = vpop.f32.mrb[0].mxu0
    %v233 = vpop.f32.mrb[0].mxu0
    %v234 = vadd.f32 0.0, %v233
    %v235 = vpop.f32.mrb[0].mxu0
    %236 = vmatprep.mubr.bf16.mxu0 0
    %237 = vmatmul.mubr.bf16.gmra.mrb[0].mxu0 %v145
    %v238 = vpop.f32.mrb[0].mxu0
    %v239 = vadd.f32 0.0, %v238
    %v240 = vpop.f32.mrb[0].mxu0
    %v241 = vpop.f32.mrb[0].mxu0
    %v242 = vadd.f32 0.0, %v241
    %v243 = vpop.f32.mrb[0].mxu0
    %244 = vdwg.mxu0
    %v245 = vpack.c.bf16 %v234, %v231
    %v246 = vpack.c.bf16 %v242, %v239
    %v247 = vadd.bf16 %v245, %v144
    %v248 = vadd.bf16 %v246, %v145
    %v249 = vunpack.c.l.bf16 %v247
    %v250 = vunpack.c.h.bf16 %v247
    %v251 = vunpack.c.l.bf16 %v248
    %v252 = vunpack.c.h.bf16 %v248
    %v253 = vmul.f32 %v249, %v249
    %v254 = vmul.f32 %v250, %v250
    %v255 = vmul.f32 %v251, %v251
    %v256 = vmul.f32 %v252, %v252
    %257 = vadd.xlane.f32.xlu0 %v253
    %v258 = vpop.xlane.xlu0 %257
    %259 = vadd.xlane.f32.xlu0 %v254
    %v260 = vpop.xlane.xlu0 %259
    %261 = vadd.xlane.f32.xlu0 %v255
    %v262 = vpop.xlane.xlu0 %261
    %263 = vadd.xlane.f32.xlu0 %v256
    %v264 = vpop.xlane.xlu0 %263
    %v265 = vrcp.pop 128.0
    %v266 = vmul.f32 %v258, %v265
    %v267 = vmul.f32 %v260, %v265
    %v268 = vmul.f32 %v262, %v265
    %v269 = vmul.f32 %v264, %v265
    %v270 = vadd.f32 %v266, 1e-05
    %v271 = vadd.f32 %v267, 1e-05
    %v272 = vadd.f32 %v268, 1e-05
    %v273 = vadd.f32 %v269, 1e-05
    %v274 = vrsqrt.pop %v270
    %v275 = vrsqrt.pop %v271
    %v276 = vrsqrt.pop %v272
    %v277 = vrsqrt.pop %v273
    %v278 = vld [vmem:[%s6] sm:$0x1]
    %v279 = vunpack.c.l.bf16 %v278
    %v280 = vmul.f32 %v249, %v274
    %v281 = vmul.f32 %v250, %v275
    %v282 = vmul.f32 %v251, %v276
    %v283 = vmul.f32 %v252, %v277
    %v284 = vlaneseq
    %v285 = vshrl.u32 %v284, 7
    %v286 = vsub.s32 0, %v285
    %v287 = vrot.slane %v279, %v286
    %v288 = vmul.f32 %v280, %v287
    %v289 = vmul.f32 %v281, %v287
    %v290 = vmul.f32 %v282, %v287
    %v291 = vmul.f32 %v283, %v287
    %v292 = vpack.c.bf16 %v289, %v288
    %v293 = vpack.c.bf16 %v291, %v290
    %v294 = vld [vmem:[#allocation7] sm:$0xf]
    %v295 = vld [vmem:[#allocation7 + $0x4] sm:$0xf]
    %v296 = vld [vmem:[#allocation7 + $0x8] sm:$0xf]
    %v297 = vld [vmem:[#allocation7 + $0xc] sm:$0xf]
    %v298 = vld [vmem:[#allocation7 + $0x10] sm:$0xf]
    %v299 = vld [vmem:[#allocation7 + $0x14] sm:$0xf]
    %v300 = vld [vmem:[#allocation7 + $0x18] sm:$0xf]
    %v301 = vld [vmem:[#allocation7 + $0x1c] sm:$0xf]
    %v302 = vld [vmem:[#allocation7 + $0x20] sm:$0xf]
    %v303 = vld [vmem:[#allocation7 + $0x24] sm:$0xf]
    %v304 = vld [vmem:[#allocation7 + $0x28] sm:$0xf]
    %v305 = vld [vmem:[#allocation7 + $0x2c] sm:$0xf]
    %v306 = vld [vmem:[#allocation7 + $0x30] sm:$0xf]
    %v307 = vld [vmem:[#allocation7 + $0x34] sm:$0xf]
    %v308 = vld [vmem:[#allocation7 + $0x38] sm:$0xf]
    %v309 = vld [vmem:[#allocation7 + $0x3c] sm:$0xf]
    %v326 = vunpack.c.l.b16 %v294
    %v327 = vunpack.c.l.b16 %v295
    %v328 = vunpack.c.l.b16 %v296
    %v329 = vunpack.c.l.b16 %v297
    %v330 = vunpack.c.l.b16 %v298
    %v331 = vunpack.c.l.b16 %v299
    %v332 = vunpack.c.l.b16 %v300
    %v333 = vunpack.c.l.b16 %v301
    %v334 = vunpack.c.l.b16 %v302
    %v335 = vunpack.c.l.b16 %v303
    %v336 = vunpack.c.l.b16 %v304
    %v337 = vunpack.c.l.b16 %v305
    %v338 = vunpack.c.l.b16 %v306
    %v339 = vunpack.c.l.b16 %v307
    %v340 = vunpack.c.l.b16 %v308
    %v341 = vunpack.c.l.b16 %v309
    %v342 = vpack.c.b16 %v327, %v326
    %v343 = vpack.c.b16 %v329, %v328
    %v344 = vpack.c.b16 %v331, %v330
    %v345 = vpack.c.b16 %v333, %v332
    %v346 = vpack.c.b16 %v335, %v334
    %v347 = vpack.c.b16 %v337, %v336
    %v348 = vpack.c.b16 %v339, %v338
    %v349 = vpack.c.b16 %v341, %v340
    %358 = vmatprep.subr.bf16.mxu0 0
    %359 = vmatpush1.bf16.msra.mxu0 %v342
    %360 = vmatprep.subr.bf16.mxu0 0
    %361 = vmatpush1.bf16.msra.mxu0 %v343
    %362 = vmatprep.subr.bf16.mxu0 0
    %363 = vmatpush1.bf16.msra.mxu0 %v344
    %364 = vmatprep.subr.bf16.mxu0 0
    %365 = vmatpush1.bf16.msra.mxu0 %v345
    %366 = vmatprep.subr.bf16.mxu0 0
    %367 = vmatpush1.bf16.msra.mxu0 %v346
    %368 = vmatprep.subr.bf16.mxu0 0
    %369 = vmatpush1.bf16.msra.mxu0 %v347
    %370 = vmatprep.subr.bf16.mxu0 0
    %371 = vmatpush1.bf16.msra.mxu0 %v348
    %372 = vmatprep.subr.bf16.mxu0 0
    %373 = vmatpush1.bf16.msra.mxu0 %v349
    %374 = vmatprep.subr.bf16.mxu0 0
    %375 = vmatpush1.bf16.msra.mxu0 0
    %376 = vmatprep.subr.bf16.mxu0 0
    %377 = vmatpush1.bf16.msra.mxu0 0
    %378 = vmatprep.subr.bf16.mxu0 0
    %379 = vmatpush1.bf16.msra.mxu0 0
    %380 = vmatprep.subr.bf16.mxu0 0
    %381 = vmatpush1.bf16.msra.mxu0 0
    %382 = vmatprep.subr.bf16.mxu0 0
    %383 = vmatpush1.bf16.msra.mxu0 0
    %384 = vmatprep.subr.bf16.mxu0 0
    %385 = vmatpush1.bf16.msra.mxu0 0
    %386 = vmatprep.subr.bf16.mxu0 0
    %387 = vmatpush1.bf16.msra.mxu0 0
    %388 = vmatprep.subr.bf16.mxu0 0
    %389 = vmatpush1.bf16.msra.mxu0 0
    %390 = vmatprep.mubr.bf16.mxu0 0
    %391 = vmatmul.mubr.bf16.gmra.mrb[0].mxu0 %v292
    %v392 = vpop.f32.mrb[0].mxu0
    %v393 = vadd.f32 0.0, %v392
    %v394 = vpop.f32.mrb[0].mxu0
    %v395 = vpop.f32.mrb[0].mxu0
    %v396 = vadd.f32 0.0, %v395
    %v397 = vpop.f32.mrb[0].mxu0
    %398 = vmatprep.mubr.bf16.mxu0 0
    %399 = vmatmul.mubr.bf16.gmra.mrb[0].mxu0 %v293
    %v400 = vpop.f32.mrb[0].mxu0
    %v401 = vadd.f32 0.0, %v400
    %v402 = vpop.f32.mrb[0].mxu0
    %v403 = vpop.f32.mrb[0].mxu0
    %v404 = vadd.f32 0.0, %v403
    %v405 = vpop.f32.mrb[0].mxu0
    %406 = vdwg.mxu0
    %v407 = vpack.c.bf16 %v396, %v393
    %v408 = vpack.c.bf16 %v404, %v401
    %v409 = vld [vmem:[#allocation8] sm:$0xf]
    %v410 = vld [vmem:[#allocation8 + $0x4] sm:$0xf]
    %v411 = vld [vmem:[#allocation8 + $0x8] sm:$0xf]
    %v412 = vld [vmem:[#allocation8 + $0xc] sm:$0xf]
    %v413 = vld [vmem:[#allocation8 + $0x10] sm:$0xf]
    %v414 = vld [vmem:[#allocation8 + $0x14] sm:$0xf]
    %v415 = vld [vmem:[#allocation8 + $0x18] sm:$0xf]
    %v416 = vld [vmem:[#allocation8 + $0x1c] sm:$0xf]
    %v417 = vld [vmem:[#allocation8 + $0x20] sm:$0xf]
    %v418 = vld [vmem:[#allocation8 + $0x24] sm:$0xf]
    %v419 = vld [vmem:[#allocation8 + $0x28] sm:$0xf]
    %v420 = vld [vmem:[#allocation8 + $0x2c] sm:$0xf]
    %v421 = vld [vmem:[#allocation8 + $0x30] sm:$0xf]
    %v422 = vld [vmem:[#allocation8 + $0x34] sm:$0xf]
    %v423 = vld [vmem:[#allocation8 + $0x38] sm:$0xf]
    %v424 = vld [vmem:[#allocation8 + $0x3c] sm:$0xf]
    %v441 = vunpack.c.l.b16 %v409
    %v442 = vunpack.c.l.b16 %v410
    %v443 = vunpack.c.l.b16 %v411
    %v444 = vunpack.c.l.b16 %v412
    %v445 = vunpack.c.l.b16 %v413
    %v446 = vunpack.c.l.b16 %v414
    %v447 = vunpack.c.l.b16 %v415
    %v448 = vunpack.c.l.b16 %v416
    %v449 = vunpack.c.l.b16 %v417
    %v450 = vunpack.c.l.b16 %v418
    %v451 = vunpack.c.l.b16 %v419
    %v452 = vunpack.c.l.b16 %v420
    %v453 = vunpack.c.l.b16 %v421
    %v454 = vunpack.c.l.b16 %v422
    %v455 = vunpack.c.l.b16 %v423
    %v456 = vunpack.c.l.b16 %v424
    %v457 = vpack.c.b16 %v442, %v441
    %v458 = vpack.c.b16 %v444, %v443
    %v459 = vpack.c.b16 %v446, %v445
    %v460 = vpack.c.b16 %v448, %v447
    %v461 = vpack.c.b16 %v450, %v449
    %v462 = vpack.c.b16 %v452, %v451
    %v463 = vpack.c.b16 %v454, %v453
    %v464 = vpack.c.b16 %v456, %v455
    %473 = vmatprep.subr.bf16.mxu0 0
    %474 = vmatpush1.bf16.msra.mxu0 %v457
    %475 = vmatprep.subr.bf16.mxu0 0
    %476 = vmatpush1.bf16.msra.mxu0 %v458
    %477 = vmatprep.subr.bf16.mxu0 0
    %478 = vmatpush1.bf16.msra.mxu0 %v459
    %479 = vmatprep.subr.bf16.mxu0 0
    %480 = vmatpush1.bf16.msra.mxu0 %v460
    %481 = vmatprep.subr.bf16.mxu0 0
    %482 = vmatpush1.bf16.msra.mxu0 %v461
    %483 = vmatprep.subr.bf16.mxu0 0
    %484 = vmatpush1.bf16.msra.mxu0 %v462
    %485 = vmatprep.subr.bf16.mxu0 0
    %486 = vmatpush1.bf16.msra.mxu0 %v463
    %487 = vmatprep.subr.bf16.mxu0 0
    %488 = vmatpush1.bf16.msra.mxu0 %v464
    %489 = vmatprep.subr.bf16.mxu0 0
    %490 = vmatpush1.bf16.msra.mxu0 0
    %491 = vmatprep.subr.bf16.mxu0 0
    %492 = vmatpush1.bf16.msra.mxu0 0
    %493 = vmatprep.subr.bf16.mxu0 0
    %494 = vmatpush1.bf16.msra.mxu0 0
    %495 = vmatprep.subr.bf16.mxu0 0
    %496 = vmatpush1.bf16.msra.mxu0 0
    %497 = vmatprep.subr.bf16.mxu0 0
    %498 = vmatpush1.bf16.msra.mxu0 0
    %499 = vmatprep.subr.bf16.mxu0 0
    %500 = vmatpush1.bf16.msra.mxu0 0
    %501 = vmatprep.subr.bf16.mxu0 0
    %502 = vmatpush1.bf16.msra.mxu0 0
    %503 = vmatprep.subr.bf16.mxu0 0
    %504 = vmatpush1.bf16.msra.mxu0 0
    %505 = vmatprep.mubr.bf16.mxu0 0
    %506 = vmatmul.mubr.bf16.gmra.mrb[0].mxu0 %v407
    %v507 = vpop.f32.mrb[0].mxu0
    %v508 = vadd.f32 0.0, %v507
    %v509 = vpop.f32.mrb[0].mxu0
    %v510 = vpop.f32.mrb[0].mxu0
    %v511 = vadd.f32 0.0, %v510
    %v512 = vpop.f32.mrb[0].mxu0
    %513 = vmatprep.mubr.bf16.mxu0 0
    %514 = vmatmul.mubr.bf16.gmra.mrb[0].mxu0 %v408
    %v515 = vpop.f32.mrb[0].mxu0
    %v516 = vadd.f32 0.0, %v515
    %v517 = vpop.f32.mrb[0].mxu0
    %v518 = vpop.f32.mrb[0].mxu0
    %v519 = vadd.f32 0.0, %v518
    %v520 = vpop.f32.mrb[0].mxu0
    %521 = vdwg.mxu0
    %v522 = vpack.c.bf16 %v511, %v508
    %v523 = vpack.c.bf16 %v519, %v516
    %v524 = vadd.bf16 %v522, %v247
    %v525 = vadd.bf16 %v523, %v248
    %v526 = vunpack.c.l.bf16 %v524
    %v527 = vunpack.c.h.bf16 %v524
    %v528 = vunpack.c.l.bf16 %v525
    %v529 = vunpack.c.h.bf16 %v525
    %v530 = vmul.f32 %v526, %v526
    %v531 = vmul.f32 %v527, %v527
    %v532 = vmul.f32 %v528, %v528
    %v533 = vmul.f32 %v529, %v529
    %534 = vadd.xlane.f32.xlu0 %v530
    %v535 = vpop.xlane.xlu0 %534
    %536 = vadd.xlane.f32.xlu0 %v531
    %v537 = vpop.xlane.xlu0 %536
    %538 = vadd.xlane.f32.xlu0 %v532
    %v539 = vpop.xlane.xlu0 %538
    %540 = vadd.xlane.f32.xlu0 %v533
    %v541 = vpop.xlane.xlu0 %540
    %v542 = vmul.f32 %v535, %v265
    %v543 = vmul.f32 %v537, %v265
    %v544 = vmul.f32 %v539, %v265
    %v545 = vmul.f32 %v541, %v265
    %v546 = vadd.f32 %v542, 1e-05
    %v547 = vadd.f32 %v543, 1e-05
    %v548 = vadd.f32 %v544, 1e-05
    %v549 = vadd.f32 %v545, 1e-05
    %v550 = vrsqrt.pop %v546
    %v551 = vrsqrt.pop %v547
    %v552 = vrsqrt.pop %v548
    %v553 = vrsqrt.pop %v549
    %v554 = vld [vmem:[%s7] sm:$0x1]
    %v555 = vunpack.c.l.bf16 %v554
    %v556 = vmul.f32 %v526, %v550
    %v557 = vmul.f32 %v527, %v551
    %v558 = vmul.f32 %v528, %v552
    %v559 = vmul.f32 %v529, %v553
    %v560 = vlaneseq
    %v561 = vshrl.u32 %v560, 7
    %v562 = vsub.s32 0, %v561
    %v563 = vrot.slane %v555, %v562
    %v564 = vmul.f32 %v556, %v563
    %v565 = vmul.f32 %v557, %v563
    %v566 = vmul.f32 %v558, %v563
    %v567 = vmul.f32 %v559, %v563
    %v568 = vpack.c.bf16 %v565, %v564
    %v569 = vpack.c.bf16 %v567, %v566
    %v570 = vld [vmem:[#allocation10] sm:$0xf]
    %v571 = vld [vmem:[#allocation10 + $0x4] sm:$0xf]
    %v572 = vld [vmem:[#allocation10 + $0x8] sm:$0xf]
    %v573 = vld [vmem:[#allocation10 + $0xc] sm:$0xf]
    %v574 = vld [vmem:[#allocation10 + $0x10] sm:$0xf]
    %v575 = vld [vmem:[#allocation10 + $0x14] sm:$0xf]
    %v576 = vld [vmem:[#allocation10 + $0x18] sm:$0xf]
    %v577 = vld [vmem:[#allocation10 + $0x1c] sm:$0xf]
    %v578 = vld [vmem:[#allocation10 + $0x20] sm:$0xf]
    %v579 = vld [vmem:[#allocation10 + $0x24] sm:$0xf]
    %v580 = vld [vmem:[#allocation10 + $0x28] sm:$0xf]
    %v581 = vld [vmem:[#allocation10 + $0x2c] sm:$0xf]
    %v582 = vld [vmem:[#allocation10 + $0x30] sm:$0xf]
    %v583 = vld [vmem:[#allocation10 + $0x34] sm:$0xf]
    %v584 = vld [vmem:[#allocation10 + $0x38] sm:$0xf]
    %v585 = vld [vmem:[#allocation10 + $0x3c] sm:$0xf]
    %v602 = vunpack.c.l.b16 %v570
    %v603 = vunpack.c.l.b16 %v571
    %v604 = vunpack.c.l.b16 %v572
    %v605 = vunpack.c.l.b16 %v573
    %v606 = vunpack.c.l.b16 %v574
    %v607 = vunpack.c.l.b16 %v575
    %v608 = vunpack.c.l.b16 %v576
    %v609 = vunpack.c.l.b16 %v577
    %v610 = vunpack.c.l.b16 %v578
    %v611 = vunpack.c.l.b16 %v579
    %v612 = vunpack.c.l.b16 %v580
    %v613 = vunpack.c.l.b16 %v581
    %v614 = vunpack.c.l.b16 %v582
    %v615 = vunpack.c.l.b16 %v583
    %v616 = vunpack.c.l.b16 %v584
    %v617 = vunpack.c.l.b16 %v585
    %v618 = vpack.c.b16 %v603, %v602
    %v619 = vpack.c.b16 %v605, %v604
    %v620 = vpack.c.b16 %v607, %v606
    %v621 = vpack.c.b16 %v609, %v608
    %v622 = vpack.c.b16 %v611, %v610
    %v623 = vpack.c.b16 %v613, %v612
    %v624 = vpack.c.b16 %v615, %v614
    %v625 = vpack.c.b16 %v617, %v616
    %634 = vmatprep.subr.bf16.mxu0 0
    %635 = vmatpush1.bf16.msra.mxu0 %v618
    %636 = vmatprep.subr.bf16.mxu0 0
    %637 = vmatpush1.bf16.msra.mxu0 %v619
    %638 = vmatprep.subr.bf16.mxu0 0
    %639 = vmatpush1.bf16.msra.mxu0 %v620
    %640 = vmatprep.subr.bf16.mxu0 0
    %641 = vmatpush1.bf16.msra.mxu0 %v621
    %642 = vmatprep.subr.bf16.mxu0 0
    %643 = vmatpush1.bf16.msra.mxu0 %v622
    %644 = vmatprep.subr.bf16.mxu0 0
    %645 = vmatpush1.bf16.msra.mxu0 %v623
    %646 = vmatprep.subr.bf16.mxu0 0
    %647 = vmatpush1.bf16.msra.mxu0 %v624
    %648 = vmatprep.subr.bf16.mxu0 0
    %649 = vmatpush1.bf16.msra.mxu0 %v625
    %650 = vmatprep.subr.bf16.mxu0 0
    %651 = vmatpush1.bf16.msra.mxu0 0
    %652 = vmatprep.subr.bf16.mxu0 0
    %653 = vmatpush1.bf16.msra.mxu0 0
    %654 = vmatprep.subr.bf16.mxu0 0
    %655 = vmatpush1.bf16.msra.mxu0 0
    %656 = vmatprep.subr.bf16.mxu0 0
    %657 = vmatpush1.bf16.msra.mxu0 0
    %658 = vmatprep.subr.bf16.mxu0 0
    %659 = vmatpush1.bf16.msra.mxu0 0
    %660 = vmatprep.subr.bf16.mxu0 0
    %661 = vmatpush1.bf16.msra.mxu0 0
    %662 = vmatprep.subr.bf16.mxu0 0
    %663 = vmatpush1.bf16.msra.mxu0 0
    %664 = vmatprep.subr.bf16.mxu0 0
    %665 = vmatpush1.bf16.msra.mxu0 0
    %666 = vmatprep.mubr.bf16.mxu0 0
    %667 = vmatmul.mubr.bf16.gmra.mrb[0].mxu0 %v568
    %v668 = vpop.f32.mrb[0].mxu0
    %v669 = vadd.f32 0.0, %v668
    %v670 = vpop.f32.mrb[0].mxu0
    %v671 = vpop.f32.mrb[0].mxu0
    %v672 = vadd.f32 0.0, %v671
    %v673 = vpop.f32.mrb[0].mxu0
    %674 = vmatprep.mubr.bf16.mxu0 0
    %675 = vmatmul.mubr.bf16.gmra.mrb[0].mxu0 %v569
    %v676 = vpop.f32.mrb[0].mxu0
    %v677 = vadd.f32 0.0, %v676
    %v678 = vpop.f32.mrb[0].mxu0
    %v679 = vpop.f32.mrb[0].mxu0
    %v680 = vadd.f32 0.0, %v679
    %v681 = vpop.f32.mrb[0].mxu0
    %682 = vdwg.mxu0
    %v683 = vpack.c.bf16 %v672, %v669
    %v684 = vpack.c.bf16 %v680, %v677
    %v685 = vld [vmem:[#allocation11] sm:$0xf]
    %v686 = vld [vmem:[#allocation11 + $0x4] sm:$0xf]
    %v687 = vld [vmem:[#allocation11 + $0x8] sm:$0xf]
    %v688 = vld [vmem:[#allocation11 + $0xc] sm:$0xf]
    %v689 = vld [vmem:[#allocation11 + $0x10] sm:$0xf]
    %v690 = vld [vmem:[#allocation11 + $0x14] sm:$0xf]
    %v691 = vld [vmem:[#allocation11 + $0x18] sm:$0xf]
    %v692 = vld [vmem:[#allocation11 + $0x1c] sm:$0xf]
    %v693 = vld [vmem:[#allocation11 + $0x20] sm:$0xf]
    %v694 = vld [vmem:[#allocation11 + $0x24] sm:$0xf]
    %v695 = vld [vmem:[#allocation11 + $0x28] sm:$0xf]
    %v696 = vld [vmem:[#allocation11 + $0x2c] sm:$0xf]
    %v697 = vld [vmem:[#allocation11 + $0x30] sm:$0xf]
    %v698 = vld [vmem:[#allocation11 + $0x34] sm:$0xf]
    %v699 = vld [vmem:[#allocation11 + $0x38] sm:$0xf]
    %v700 = vld [vmem:[#allocation11 + $0x3c] sm:$0xf]
    %v717 = vunpack.c.l.b16 %v685
    %v718 = vunpack.c.l.b16 %v686
    %v719 = vunpack.c.l.b16 %v687
    %v720 = vunpack.c.l.b16 %v688
    %v721 = vunpack.c.l.b16 %v689
    %v722 = vunpack.c.l.b16 %v690
    %v723 = vunpack.c.l.b16 %v691
    %v724 = vunpack.c.l.b16 %v692
    %v725 = vunpack.c.l.b16 %v693
    %v726 = vunpack.c.l.b16 %v694
    %v727 = vunpack.c.l.b16 %v695
    %v728 = vunpack.c.l.b16 %v696
    %v729 = vunpack.c.l.b16 %v697
    %v730 = vunpack.c.l.b16 %v698
    %v731 = vunpack.c.l.b16 %v699
    %v732 = vunpack.c.l.b16 %v700
    %v733 = vpack.c.b16 %v718, %v717
    %v734 = vpack.c.b16 %v720, %v719
    %v735 = vpack.c.b16 %v722, %v721
    %v736 = vpack.c.b16 %v724, %v723
    %v737 = vpack.c.b16 %v726, %v725
    %v738 = vpack.c.b16 %v728, %v727
    %v739 = vpack.c.b16 %v730, %v729
    %v740 = vpack.c.b16 %v732, %v731
    %749 = vmatprep.subr.bf16.mxu0 0
    %750 = vmatpush1.bf16.msra.mxu0 %v733
    %751 = vmatprep.subr.bf16.mxu0 0
    %752 = vmatpush1.bf16.msra.mxu0 %v734
    %753 = vmatprep.subr.bf16.mxu0 0
    %754 = vmatpush1.bf16.msra.mxu0 %v735
    %755 = vmatprep.subr.bf16.mxu0 0
    %756 = vmatpush1.bf16.msra.mxu0 %v736
    %757 = vmatprep.subr.bf16.mxu0 0
    %758 = vmatpush1.bf16.msra.mxu0 %v737
    %759 = vmatprep.subr.bf16.mxu0 0
    %760 = vmatpush1.bf16.msra.mxu0 %v738
    %761 = vmatprep.subr.bf16.mxu0 0
    %762 = vmatpush1.bf16.msra.mxu0 %v739
    %763 = vmatprep.subr.bf16.mxu0 0
    %764 = vmatpush1.bf16.msra.mxu0 %v740
    %765 = vmatprep.subr.bf16.mxu0 0
    %766 = vmatpush1.bf16.msra.mxu0 0
    %767 = vmatprep.subr.bf16.mxu0 0
    %768 = vmatpush1.bf16.msra.mxu0 0
    %769 = vmatprep.subr.bf16.mxu0 0
    %770 = vmatpush1.bf16.msra.mxu0 0
    %771 = vmatprep.subr.bf16.mxu0 0
    %772 = vmatpush1.bf16.msra.mxu0 0
    %773 = vmatprep.subr.bf16.mxu0 0
    %774 = vmatpush1.bf16.msra.mxu0 0
    %775 = vmatprep.subr.bf16.mxu0 0
    %776 = vmatpush1.bf16.msra.mxu0 0
    %777 = vmatprep.subr.bf16.mxu0 0
    %778 = vmatpush1.bf16.msra.mxu0 0
    %779 = vmatprep.subr.bf16.mxu0 0
    %780 = vmatpush1.bf16.msra.mxu0 0
    %781 = vmatprep.mubr.bf16.mxu0 0
    %782 = vmatmul.mubr.bf16.gmra.mrb[0].mxu0 %v683
    %v783 = vpop.f32.mrb[0].mxu0
    %v784 = vadd.f32 0.0, %v783
    %v785 = vpop.f32.mrb[0].mxu0
    %v786 = vpop.f32.mrb[0].mxu0
    %v787 = vadd.f32 0.0, %v786
    %v788 = vpop.f32.mrb[0].mxu0
    %789 = vmatprep.mubr.bf16.mxu0 0
    %790 = vmatmul.mubr.bf16.gmra.mrb[0].mxu0 %v684
    %v791 = vpop.f32.mrb[0].mxu0
    %v792 = vadd.f32 0.0, %v791
    %v793 = vpop.f32.mrb[0].mxu0
    %v794 = vpop.f32.mrb[0].mxu0
    %v795 = vadd.f32 0.0, %v794
    %v796 = vpop.f32.mrb[0].mxu0
    %797 = vdwg.mxu0
    %v798 = vpack.c.bf16 %v787, %v784
    %v799 = vpack.c.bf16 %v795, %v792
    %v800 = vadd.bf16 %v798, %v524
    %v801 = vadd.bf16 %v799, %v525
    %v802 = vunpack.c.l.bf16 %v800
    %v803 = vunpack.c.h.bf16 %v800
    %v804 = vunpack.c.l.bf16 %v801
    %v805 = vunpack.c.h.bf16 %v801
    %v806 = vmul.f32 %v802, %v802
    %v807 = vmul.f32 %v803, %v803
    %v808 = vmul.f32 %v804, %v804
    %v809 = vmul.f32 %v805, %v805
    %810 = vadd.xlane.f32.xlu0 %v806
    %v811 = vpop.xlane.xlu0 %810
    %812 = vadd.xlane.f32.xlu0 %v807
    %v813 = vpop.xlane.xlu0 %812
    %814 = vadd.xlane.f32.xlu0 %v808
    %v815 = vpop.xlane.xlu0 %814
    %816 = vadd.xlane.f32.xlu0 %v809
    %v817 = vpop.xlane.xlu0 %816
    %v818 = vmul.f32 %v811, %v265
    %v819 = vmul.f32 %v813, %v265
    %v820 = vmul.f32 %v815, %v265
    %v821 = vmul.f32 %v817, %v265
    %v822 = vadd.f32 %v818, 1e-05
    %v823 = vadd.f32 %v819, 1e-05
    %v824 = vadd.f32 %v820, 1e-05
    %v825 = vadd.f32 %v821, 1e-05
    %v826 = vrsqrt.pop %v822
    %v827 = vrsqrt.pop %v823
    %v828 = vrsqrt.pop %v824
    %v829 = vrsqrt.pop %v825
    %v830 = vld [vmem:[%s8] sm:$0x1]
    %v831 = vunpack.c.l.bf16 %v830
    %v832 = vmul.f32 %v802, %v826
    %v833 = vmul.f32 %v803, %v827
    %v834 = vmul.f32 %v804, %v828
    %v835 = vmul.f32 %v805, %v829
    %v836 = vlaneseq
    %v837 = vshrl.u32 %v836, 7
    %v838 = vsub.s32 0, %v837
    %v839 = vrot.slane %v831, %v838
    %v840 = vmul.f32 %v832, %v839
    %v841 = vmul.f32 %v833, %v839
    %v842 = vmul.f32 %v834, %v839
    %v843 = vmul.f32 %v835, %v839
    %v844 = vpack.c.bf16 %v841, %v840
    %v845 = vpack.c.bf16 %v843, %v842
    %v848 = vunpack.c.l.b16 %v844
    %v849 = vunpack.c.h.b16 %v844
    %v850 = vunpack.c.l.b16 %v845
    %v851 = vunpack.c.h.b16 %v845
    %v852 = vpack.c.b16 %v848, %v848
    %v853 = vpack.c.b16 %v849, %v849
    %v854 = vpack.c.b16 %v850, %v850
    %v855 = vpack.c.b16 %v851, %v851
    %860 = vst [vmem:[#allocation13] sm:$0xf] %v852
    %861 = vst [vmem:[#allocation13 + $0x4] sm:$0xf] %v853
    %862 = vst [vmem:[#allocation13 + $0x8] sm:$0xf] %v854
    %863 = vst [vmem:[#allocation13 + $0xc] sm:$0xf] %v855
    // Predicated region
    $region62: #{tpu_custom_call.1} parent=1 // pred_check
      _
    $region63: #{tpu_custom_call.1} parent=1 // pred_check_branch
      %865 = sbr.rel (0) target = $region65
    $region64: #{tpu_custom_call.1} parent=1 // pred_region
      %s867 = ssub.s32 256, 256
      %868 = vsyncadd [#allocation4], %s867
      %s869 = sshll.u32 [#allocation13], 4
      %s870 = int_to_ptr.vmem [resolvable:$true] %s869
      %875 = dma.vmem_to_hbm [thread:$0]  %s870, 256, %s9, [#allocation4], 64, 64, 4
    $region65: #{tpu_custom_call.1} parent=1 // pred_fallthru
      _
    // Predicated region
    $region66: #{tpu_custom_call.1} parent=1 // pred_check
      _
    $region67: #{tpu_custom_call.1} parent=1 // pred_check_branch
      %877 = sbr.rel (0) target = $region69
    $region68: #{tpu_custom_call.1} parent=1 // pred_region
      %878 = dma.done [#allocation4], 256
    $region69: #{tpu_custom_call.1} parent=1 // pred_fallthru
      _
    %879 = vsyncpa [#allocation3], 1
    %880 = vsyncpa [#allocation6], 1
    %881 = vsyncpa [#allocation9], 1
    %882 = vsyncpa [#allocation12], 1
    %883 = vsyncpa [#allocation4], 1

// kernel: tpu_custom_call.1
$region0: #{tpu_custom_call.1}
  #allocation0 [shape = 'u32[]', space=smem, size = 0x4, offset = 0x4, fixed_abs, tag = 'smem constant byte address 0x4 - core index']
  #allocation1 [shape = 'u32[144,128]{1,0:T(1,128)}', space=vmem, size = 0x12000, scoped, tag = 'internal scratch']
  %s0 = inlined_call_operand.hbm [shape: bf16[32,128], index: 0, kind: input, shape index: {}]
  %s1 = inlined_call_operand.hbm [shape: bf16[128,128], index: 1, kind: input, shape index: {}]
  %s2 = inlined_call_operand.hbm [shape: bf16[128,128], index: 2, kind: input, shape index: {}]
  %s3 = inlined_call_operand.hbm [shape: bf16[128,128], index: 3, kind: input, shape index: {}]
  %s4 = inlined_call_operand.hbm [shape: bf16[128,128], index: 4, kind: input, shape index: {}]
  %s5 = inlined_call_operand.hbm [shape: bf16[128,128], index: 5, kind: input, shape index: {}]
  %s6 = inlined_call_operand.vmem [shape: bf16[1,128], index: 6, kind: input, shape index: {}]
  %s7 = inlined_call_operand.vmem [shape: bf16[1,128], index: 7, kind: input, shape index: {}]
  %s8 = inlined_call_operand.vmem [shape: bf16[1,128], index: 8, kind: input, shape index: {}]
  %s9 = inlined_call_operand.hbm [shape: bf16[32,128], index: 9, kind: output, shape index: {}]
  %s10 = sld [smem:[#allocation0]]
  $region70: #{tpu_custom_call.1} parent=0
    _
  %s12 = ssub.s32 1, %s10
  %s13 = scalar_select 0, %s12, %s10
  $region1: #{tpu_custom_call.1} parent=0
    #allocation2 [shape = 'u8[8192]{0}', space=vmem, size = 0x2000, scoped, tag = 'input window, operand 0, single buffered']
    #allocation3 [shape = 's32[1]{0}', space=sflag, size = 0x4, scoped, tag = 'scoped memory for tpu_custom_call.1']
    #allocation4 [shape = 's32[1]{0}', space=sflag, size = 0x4, scoped, tag = 'scoped memory for tpu_custom_call.1']
    #allocation5 [shape = 'u8[32768]{0}', space=vmem, size = 0x8000, scoped, tag = 'input window, operand 1, single buffered']
    #allocation6 [shape = 's32[1]{0}', space=sflag, size = 0x4, scoped, tag = 'scoped memory for tpu_custom_call.1']
    #allocation7 [shape = 'u8[32768]{0}', space=vmem, size = 0x8000, scoped, tag = 'input window, operand 2, single buffered']
    #allocation8 [shape = 'u8[32768]{0}', space=vmem, size = 0x8000, scoped, tag = 'input window, operand 3, single buffered']
    #allocation9 [shape = 's32[1]{0}', space=sflag, size = 0x4, scoped, tag = 'scoped memory for tpu_custom_call.1']
    #allocation10 [shape = 'u8[32768]{0}', space=vmem, size = 0x8000, scoped, tag = 'input window, operand 4, single buffered']
    #allocation11 [shape = 'u8[32768]{0}', space=vmem, size = 0x8000, scoped, tag = 'input window, operand 5, single buffered']
    #allocation12 [shape = 's32[1]{0}', space=sflag, size = 0x4, scoped, tag = 'scoped memory for tpu_custom_call.1']
    #allocation13 [shape = 'u8[8192]{0}', space=vmem, size = 0x2000, scoped, tag = 'output window, operand 0, single buffered']
    %14 = vsyncpa [#allocation3], 0
    %15 = vsyncpa [#allocation6], 0
    %16 = vsyncpa [#allocation9], 0
    %17 = vsyncpa [#allocation12], 0
    %18 = vsyncpa [#allocation4], 0
    // Predicated region
    $region2: #{tpu_custom_call.1} parent=1 // pred_check
      _
    $region3: #{tpu_custom_call.1} parent=1 // pred_check_branch
      %20 = sbr.rel (0) target = $region5
    $region4: #{tpu_custom_call.1} parent=1 // pred_region
      %s22 = ssub.s32 256, 256
      %23 = vsyncadd [#allocation3], %s22
      %s24 = sshll.u32 [#allocation2], 4
      %s25 = int_to_ptr.vmem [resolvable:$true] %s24
      %30 = dma.hbm_to_vmem [thread:$0]  %s0, 256, %s25, [#allocation3], 64, 64, 4
    $region5: #{tpu_custom_call.1} parent=1 // pred_fallthru
      _
    // Predicated region
    $region6: #{tpu_custom_call.1} parent=1 // pred_check
      _
    $region7: #{tpu_custom_call.1} parent=1 // pred_check_branch
      %32 = sbr.rel (0) target = $region9
    $region8: #{tpu_custom_call.1} parent=1 // pred_region
      %s34 = ssub.s32 1024, 1024
      %35 = vsyncadd [#allocation6], %s34
      %s36 = sshll.u32 [#allocation5], 4
      %s37 = int_to_ptr.vmem [resolvable:$true] %s36
      %42 = dma.hbm_to_vmem [thread:$0]  %s1, 1024, %s37, [#allocation6], 64, 64, 4
    $region9: #{tpu_custom_call.1} parent=1 // pred_fallthru
      _
    // Predicated region
    $region10: #{tpu_custom_call.1} parent=1 // pred_check
      _
    $region11: #{tpu_custom_call.1} parent=1 // pred_check_branch
      %44 = sbr.rel (0) target = $region13
    $region12: #{tpu_custom_call.1} parent=1 // pred_region
      %s46 = ssub.s32 1024, 1024
      %47 = vsyncadd [#allocation6], %s46
      %s48 = sshll.u32 [#allocation7], 4
      %s49 = int_to_ptr.vmem [resolvable:$true] %s48
      %54 = dma.hbm_to_vmem [thread:$0]  %s2, 1024, %s49, [#allocation6], 64, 64, 4
    $region13: #{tpu_custom_call.1} parent=1 // pred_fallthru
      _
    // Predicated region
    $region14: #{tpu_custom_call.1} parent=1 // pred_check
      _
    $region15: #{tpu_custom_call.1} parent=1 // pred_check_branch
      %56 = sbr.rel (0) target = $region17
    $region16: #{tpu_custom_call.1} parent=1 // pred_region
      %s58 = ssub.s32 1024, 1024
      %59 = vsyncadd [#allocation9], %s58
      %s60 = sshll.u32 [#allocation8], 4
      %s61 = int_to_ptr.vmem [resolvable:$true] %s60
      %66 = dma.hbm_to_vmem [thread:$0]  %s3, 1024, %s61, [#allocation9], 64, 64, 4
    $region17: #{tpu_custom_call.1} parent=1 // pred_fallthru
      _
    // Predicated region
    $region18: #{tpu_custom_call.1} parent=1 // pred_check
      _
    $region19: #{tpu_custom_call.1} parent=1 // pred_check_branch
      %68 = sbr.rel (0) target = $region21
    $region20: #{tpu_custom_call.1} parent=1 // pred_region
      %s70 = ssub.s32 1024, 1024
      %71 = vsyncadd [#allocation9], %s70
      %s72 = sshll.u32 [#allocation10], 4
      %s73 = int_to_ptr.vmem [resolvable:$true] %s72
      %78 = dma.hbm_to_vmem [thread:$0]  %s4, 1024, %s73, [#allocation9], 64, 64, 4
    $region21: #{tpu_custom_call.1} parent=1 // pred_fallthru
      _
    // Predicated region
    $region22: #{tpu_custom_call.1} parent=1 // pred_check
      _
    $region23: #{tpu_custom_call.1} parent=1 // pred_check_branch
      %80 = sbr.rel (0) target = $region25
    $region24: #{tpu_custom_call.1} parent=1 // pred_region
      %s82 = ssub.s32 1024, 1024
      %83 = vsyncadd [#allocation12], %s82
      %s84 = sshll.u32 [#allocation11], 4
      %s85 = int_to_ptr.vmem [resolvable:$true] %s84
      %90 = dma.hbm_to_vmem [thread:$0]  %s5, 1024, %s85, [#allocation12], 64, 64, 4
    $region25: #{tpu_custom_call.1} parent=1 // pred_fallthru
      _
    // Predicated region
    $region26: #{tpu_custom_call.1} parent=1 // pred_check
      _
    $region27: #{tpu_custom_call.1} parent=1 // pred_check_branch
      %92 = sbr.rel (0) target = $region29
    $region28: #{tpu_custom_call.1} parent=1 // pred_region
      _
    $region29: #{tpu_custom_call.1} parent=1 // pred_fallthru
      _
    // Predicated region
    $region30: #{tpu_custom_call.1} parent=1 // pred_check
      _
    $region31: #{tpu_custom_call.1} parent=1 // pred_check_branch
      %94 = sbr.rel (0) target = $region33
    $region32: #{tpu_custom_call.1} parent=1 // pred_region
      _
    $region33: #{tpu_custom_call.1} parent=1 // pred_fallthru
      _
    // Predicated region
    $region34: #{tpu_custom_call.1} parent=1 // pred_check
      _
    $region35: #{tpu_custom_call.1} parent=1 // pred_check_branch
      %96 = sbr.rel (0) target = $region37
    $region36: #{tpu_custom_call.1} parent=1 // pred_region
      _
    $region37: #{tpu_custom_call.1} parent=1 // pred_fallthru
      _
    // Predicated region
    $region38: #{tpu_custom_call.1} parent=1 // pred_check
      _
    $region39: #{tpu_custom_call.1} parent=1 // pred_check_branch
      %98 = sbr.rel (0) target = $region41
    $region40: #{tpu_custom_call.1} parent=1 // pred_region
      %99 = dma.done [#allocation3], 256
    $region41: #{tpu_custom_call.1} parent=1 // pred_fallthru
      _
    // Predicated region
    $region42: #{tpu_custom_call.1} parent=1 // pred_check
      _
    $region43: #{tpu_custom_call.1} parent=1 // pred_check_branch
      %101 = sbr.rel (0) target = $region45
    $region44: #{tpu_custom_call.1} parent=1 // pred_region
      %102 = dma.done [#allocation6], 1024
    $region45: #{tpu_custom_call.1} parent=1 // pred_fallthru
      _
    // Predicated region
    $region46: #{tpu_custom_call.1} parent=1 // pred_check
      _
    $region47: #{tpu_custom_call.1} parent=1 // pred_check_branch
      %104 = sbr.rel (0) target = $region49
    $region48: #{tpu_custom_call.1} parent=1 // pred_region
      %105 = dma.done [#allocation6], 1024
    $region49: #{tpu_custom_call.1} parent=1 // pred_fallthru
      _
    // Predicated region
    $region50: #{tpu_custom_call.1} parent=1 // pred_check
      _
    $region51: #{tpu_custom_call.1} parent=1 // pred_check_branch
      %107 = sbr.rel (0) target = $region53
    $region52: #{tpu_custom_call.1} parent=1 // pred_region
      %108 = dma.done [#allocation9], 1024
    $region53: #{tpu_custom_call.1} parent=1 // pred_fallthru
      _
    // Predicated region
    $region54: #{tpu_custom_call.1} parent=1 // pred_check
      _
    $region55: #{tpu_custom_call.1} parent=1 // pred_check_branch
      %110 = sbr.rel (0) target = $region57
    $region56: #{tpu_custom_call.1} parent=1 // pred_region
      %111 = dma.done [#allocation9], 1024
    $region57: #{tpu_custom_call.1} parent=1 // pred_fallthru
      _
    // Predicated region
    $region58: #{tpu_custom_call.1} parent=1 // pred_check
      _
    $region59: #{tpu_custom_call.1} parent=1 // pred_check_branch
      %113 = sbr.rel (0) target = $region61
    $region60: #{tpu_custom_call.1} parent=1 // pred_region
      %114 = dma.done [#allocation12], 1024
    $region61: #{tpu_custom_call.1} parent=1 // pred_fallthru
      _
    %v116 = vld [vmem:[#allocation2] sm:$0xf]
    %v117 = vld [vmem:[#allocation2 + $0x4] sm:$0xf]
    %v118 = vld [vmem:[#allocation2 + $0x8] sm:$0xf]
    %v119 = vld [vmem:[#allocation2 + $0xc] sm:$0xf]
    %v120 = vld [vmem:[#allocation5] sm:$0xf]
    %v121 = vld [vmem:[#allocation5 + $0x4] sm:$0xf]
    %v122 = vld [vmem:[#allocation5 + $0x8] sm:$0xf]
    %v123 = vld [vmem:[#allocation5 + $0xc] sm:$0xf]
    %v124 = vld [vmem:[#allocation5 + $0x10] sm:$0xf]
    %v125 = vld [vmem:[#allocation5 + $0x14] sm:$0xf]
    %v126 = vld [vmem:[#allocation5 + $0x18] sm:$0xf]
    %v127 = vld [vmem:[#allocation5 + $0x1c] sm:$0xf]
    %v128 = vld [vmem:[#allocation5 + $0x20] sm:$0xf]
    %v129 = vld [vmem:[#allocation5 + $0x24] sm:$0xf]
    %v130 = vld [vmem:[#allocation5 + $0x28] sm:$0xf]
    %v131 = vld [vmem:[#allocation5 + $0x2c] sm:$0xf]
    %v132 = vld [vmem:[#allocation5 + $0x30] sm:$0xf]
    %v133 = vld [vmem:[#allocation5 + $0x34] sm:$0xf]
    %v134 = vld [vmem:[#allocation5 + $0x38] sm:$0xf]
    %v135 = vld [vmem:[#allocation5 + $0x3c] sm:$0xf]
    %v140 = vunpack.c.l.b16 %v116
    %v141 = vunpack.c.l.b16 %v117
    %v142 = vunpack.c.l.b16 %v118
    %v143 = vunpack.c.l.b16 %v119
    %v144 = vpack.c.b16 %v141, %v140
    %v145 = vpack.c.b16 %v143, %v142
    %v164 = vunpack.c.l.b16 %v120
    %v165 = vunpack.c.l.b16 %v121
    %v166 = vunpack.c.l.b16 %v122
    %v167 = vunpack.c.l.b16 %v123
    %v168 = vunpack.c.l.b16 %v124
    %v169 = vunpack.c.l.b16 %v125
    %v170 = vunpack.c.l.b16 %v126
    %v171 = vunpack.c.l.b16 %v127
    %v172 = vunpack.c.l.b16 %v128
    %v173 = vunpack.c.l.b16 %v129
    %v174 = vunpack.c.l.b16 %v130
    %v175 = vunpack.c.l.b16 %v131
    %v176 = vunpack.c.l.b16 %v132
    %v177 = vunpack.c.l.b16 %v133
    %v178 = vunpack.c.l.b16 %v134
    %v179 = vunpack.c.l.b16 %v135
    %v180 = vpack.c.b16 %v165, %v164
    %v181 = vpack.c.b16 %v167, %v166
    %v182 = vpack.c.b16 %v169, %v168
    %v183 = vpack.c.b16 %v171, %v170
    %v184 = vpack.c.b16 %v173, %v172
    %v185 = vpack.c.b16 %v175, %v174
    %v186 = vpack.c.b16 %v177, %v176
    %v187 = vpack.c.b16 %v179, %v178
    %196 = vmatprep.subr.bf16.mxu0 0
    %197 = vmatpush1.bf16.msra.mxu0 %v180
    %198 = vmatprep.subr.bf16.mxu0 0
    %199 = vmatpush1.bf16.msra.mxu0 %v181
    %200 = vmatprep.subr.bf16.mxu0 0
    %201 = vmatpush1.bf16.msra.mxu0 %v182
    %202 = vmatprep.subr.bf16.mxu0 0
    %203 = vmatpush1.bf16.msra.mxu0 %v183
    %204 = vmatprep.subr.bf16.mxu0 0
    %205 = vmatpush1.bf16.msra.mxu0 %v184
    %206 = vmatprep.subr.bf16.mxu0 0
    %207 = vmatpush1.bf16.msra.mxu0 %v185
    %208 = vmatprep.subr.bf16.mxu0 0
    %209 = vmatpush1.bf16.msra.mxu0 %v186
    %210 = vmatprep.subr.bf16.mxu0 0
    %211 = vmatpush1.bf16.msra.mxu0 %v187
    %212 = vmatprep.subr.bf16.mxu0 0
    %213 = vmatpush1.bf16.msra.mxu0 0
    %214 = vmatprep.subr.bf16.mxu0 0
    %215 = vmatpush1.bf16.msra.mxu0 0
    %216 = vmatprep.subr.bf16.mxu0 0
    %217 = vmatpush1.bf16.msra.mxu0 0
    %218 = vmatprep.subr.bf16.mxu0 0
    %219 = vmatpush1.bf16.msra.mxu0 0
    %220 = vmatprep.subr.bf16.mxu0 0
    %221 = vmatpush1.bf16.msra.mxu0 0
    %222 = vmatprep.subr.bf16.mxu0 0
    %223 = vmatpush1.bf16.msra.mxu0 0
    %224 = vmatprep.subr.bf16.mxu0 0
    %225 = vmatpush1.bf16.msra.mxu0 0
    %226 = vmatprep.subr.bf16.mxu0 0
    %227 = vmatpush1.bf16.msra.mxu0 0
    %228 = vmatprep.mubr.bf16.mxu0 0
    %229 = vmatmul.mubr.bf16.gmra.mrb[0].mxu0 %v144
    %v230 = vpop.f32.mrb[0].mxu0
    %v231 = vadd.f32 0.0, %v230
    %v232 = vpop.f32.mrb[0].mxu0
    %v233 = vpop.f32.mrb[0].mxu0
    %v234 = vadd.f32 0.0, %v233
    %v235 = vpop.f32.mrb[0].mxu0
    %236 = vmatprep.mubr.bf16.mxu0 0
    %237 = vmatmul.mubr.bf16.gmra.mrb[0].mxu0 %v145
    %v238 = vpop.f32.mrb[0].mxu0
    %v239 = vadd.f32 0.0, %v238
    %v240 = vpop.f32.mrb[0].mxu0
    %v241 = vpop.f32.mrb[0].mxu0
    %v242 = vadd.f32 0.0, %v241
    %v243 = vpop.f32.mrb[0].mxu0
    %244 = vdwg.mxu0
    %v245 = vpack.c.bf16 %v234, %v231
    %v246 = vpack.c.bf16 %v242, %v239
    %v247 = vadd.bf16 %v245, %v144
    %v248 = vadd.bf16 %v246, %v145
    %v249 = vunpack.c.l.bf16 %v247
    %v250 = vunpack.c.h.bf16 %v247
    %v251 = vunpack.c.l.bf16 %v248
    %v252 = vunpack.c.h.bf16 %v248
    %v253 = vmul.f32 %v249, %v249
    %v254 = vmul.f32 %v250, %v250
    %v255 = vmul.f32 %v251, %v251
    %v256 = vmul.f32 %v252, %v252
    %257 = vadd.xlane.f32.xlu0 %v253
    %v258 = vpop.xlane.xlu0 %257
    %259 = vadd.xlane.f32.xlu0 %v254
    %v260 = vpop.xlane.xlu0 %259
    %261 = vadd.xlane.f32.xlu0 %v255
    %v262 = vpop.xlane.xlu0 %261
    %263 = vadd.xlane.f32.xlu0 %v256
    %v264 = vpop.xlane.xlu0 %263
    %v265 = vrcp.pop 128.0
    %v266 = vmul.f32 %v258, %v265
    %v267 = vmul.f32 %v260, %v265
    %v268 = vmul.f32 %v262, %v265
    %v269 = vmul.f32 %v264, %v265
    %v270 = vadd.f32 %v266, 1e-05
    %v271 = vadd.f32 %v267, 1e-05
    %v272 = vadd.f32 %v268, 1e-05
    %v273 = vadd.f32 %v269, 1e-05
    %v274 = vrsqrt.pop %v270
    %v275 = vrsqrt.pop %v271
    %v276 = vrsqrt.pop %v272
    %v277 = vrsqrt.pop %v273
    %v278 = vld [vmem:[%s6] sm:$0x1]
    %v279 = vunpack.c.l.bf16 %v278
    %v280 = vmul.f32 %v249, %v274
    %v281 = vmul.f32 %v250, %v275
    %v282 = vmul.f32 %v251, %v276
    %v283 = vmul.f32 %v252, %v277
    %v284 = vlaneseq
    %v285 = vshrl.u32 %v284, 7
    %v286 = vsub.s32 0, %v285
    %v287 = vrot.slane %v279, %v286
    %v288 = vmul.f32 %v280, %v287
    %v289 = vmul.f32 %v281, %v287
    %v290 = vmul.f32 %v282, %v287
    %v291 = vmul.f32 %v283, %v287
    %v292 = vpack.c.bf16 %v289, %v288
    %v293 = vpack.c.bf16 %v291, %v290
    %v294 = vld [vmem:[#allocation7] sm:$0xf]
    %v295 = vld [vmem:[#allocation7 + $0x4] sm:$0xf]
    %v296 = vld [vmem:[#allocation7 + $0x8] sm:$0xf]
    %v297 = vld [vmem:[#allocation7 + $0xc] sm:$0xf]
    %v298 = vld [vmem:[#allocation7 + $0x10] sm:$0xf]
    %v299 = vld [vmem:[#allocation7 + $0x14] sm:$0xf]
    %v300 = vld [vmem:[#allocation7 + $0x18] sm:$0xf]
    %v301 = vld [vmem:[#allocation7 + $0x1c] sm:$0xf]
    %v302 = vld [vmem:[#allocation7 + $0x20] sm:$0xf]
    %v303 = vld [vmem:[#allocation7 + $0x24] sm:$0xf]
    %v304 = vld [vmem:[#allocation7 + $0x28] sm:$0xf]
    %v305 = vld [vmem:[#allocation7 + $0x2c] sm:$0xf]
    %v306 = vld [vmem:[#allocation7 + $0x30] sm:$0xf]
    %v307 = vld [vmem:[#allocation7 + $0x34] sm:$0xf]
    %v308 = vld [vmem:[#allocation7 + $0x38] sm:$0xf]
    %v309 = vld [vmem:[#allocation7 + $0x3c] sm:$0xf]
    %v326 = vunpack.c.l.b16 %v294
    %v327 = vunpack.c.l.b16 %v295
    %v328 = vunpack.c.l.b16 %v296
    %v329 = vunpack.c.l.b16 %v297
    %v330 = vunpack.c.l.b16 %v298
    %v331 = vunpack.c.l.b16 %v299
    %v332 = vunpack.c.l.b16 %v300
    %v333 = vunpack.c.l.b16 %v301
    %v334 = vunpack.c.l.b16 %v302
    %v335 = vunpack.c.l.b16 %v303
    %v336 = vunpack.c.l.b16 %v304
    %v337 = vunpack.c.l.b16 %v305
    %v338 = vunpack.c.l.b16 %v306
    %v339 = vunpack.c.l.b16 %v307
    %v340 = vunpack.c.l.b16 %v308
    %v341 = vunpack.c.l.b16 %v309
    %v342 = vpack.c.b16 %v327, %v326
    %v343 = vpack.c.b16 %v329, %v328
    %v344 = vpack.c.b16 %v331, %v330
    %v345 = vpack.c.b16 %v333, %v332
    %v346 = vpack.c.b16 %v335, %v334
    %v347 = vpack.c.b16 %v337, %v336
    %v348 = vpack.c.b16 %v339, %v338
    %v349 = vpack.c.b16 %v341, %v340
    %358 = vmatprep.subr.bf16.mxu0 0
    %359 = vmatpush1.bf16.msra.mxu0 %v342
    %360 = vmatprep.subr.bf16.mxu0 0
    %361 = vmatpush1.bf16.msra.mxu0 %v343
    %362 = vmatprep.subr.bf16.mxu0 0
    %363 = vmatpush1.bf16.msra.mxu0 %v344
    %364 = vmatprep.subr.bf16.mxu0 0
    %365 = vmatpush1.bf16.msra.mxu0 %v345
    %366 = vmatprep.subr.bf16.mxu0 0
    %367 = vmatpush1.bf16.msra.mxu0 %v346
    %368 = vmatprep.subr.bf16.mxu0 0
    %369 = vmatpush1.bf16.msra.mxu0 %v347
    %370 = vmatprep.subr.bf16.mxu0 0
    %371 = vmatpush1.bf16.msra.mxu0 %v348
    %372 = vmatprep.subr.bf16.mxu0 0
    %373 = vmatpush1.bf16.msra.mxu0 %v349
    %374 = vmatprep.subr.bf16.mxu0 0
    %375 = vmatpush1.bf16.msra.mxu0 0
    %376 = vmatprep.subr.bf16.mxu0 0
    %377 = vmatpush1.bf16.msra.mxu0 0
    %378 = vmatprep.subr.bf16.mxu0 0
    %379 = vmatpush1.bf16.msra.mxu0 0
    %380 = vmatprep.subr.bf16.mxu0 0
    %381 = vmatpush1.bf16.msra.mxu0 0
    %382 = vmatprep.subr.bf16.mxu0 0
    %383 = vmatpush1.bf16.msra.mxu0 0
    %384 = vmatprep.subr.bf16.mxu0 0
    %385 = vmatpush1.bf16.msra.mxu0 0
    %386 = vmatprep.subr.bf16.mxu0 0
    %387 = vmatpush1.bf16.msra.mxu0 0
    %388 = vmatprep.subr.bf16.mxu0 0
    %389 = vmatpush1.bf16.msra.mxu0 0
    %390 = vmatprep.mubr.bf16.mxu0 0
    %391 = vmatmul.mubr.bf16.gmra.mrb[0].mxu0 %v292
    %v392 = vpop.f32.mrb[0].mxu0
    %v393 = vadd.f32 0.0, %v392
    %v394 = vpop.f32.mrb[0].mxu0
    %v395 = vpop.f32.mrb[0].mxu0
    %v396 = vadd.f32 0.0, %v395
    %v397 = vpop.f32.mrb[0].mxu0
    %398 = vmatprep.mubr.bf16.mxu0 0
    %399 = vmatmul.mubr.bf16.gmra.mrb[0].mxu0 %v293
    %v400 = vpop.f32.mrb[0].mxu0
    %v401 = vadd.f32 0.0, %v400
    %v402 = vpop.f32.mrb[0].mxu0
    %v403 = vpop.f32.mrb[0].mxu0
    %v404 = vadd.f32 0.0, %v403
    %v405 = vpop.f32.mrb[0].mxu0
    %406 = vdwg.mxu0
    %v407 = vpack.c.bf16 %v396, %v393
    %v408 = vpack.c.bf16 %v404, %v401
    %v409 = vld [vmem:[#allocation8] sm:$0xf]
    %v410 = vld [vmem:[#allocation8 + $0x4] sm:$0xf]
    %v411 = vld [vmem:[#allocation8 + $0x8] sm:$0xf]
    %v412 = vld [vmem:[#allocation8 + $0xc] sm:$0xf]
    %v413 = vld [vmem:[#allocation8 + $0x10] sm:$0xf]
    %v414 = vld [vmem:[#allocation8 + $0x14] sm:$0xf]
    %v415 = vld [vmem:[#allocation8 + $0x18] sm:$0xf]
    %v416 = vld [vmem:[#allocation8 + $0x1c] sm:$0xf]
    %v417 = vld [vmem:[#allocation8 + $0x20] sm:$0xf]
    %v418 = vld [vmem:[#allocation8 + $0x24] sm:$0xf]
    %v419 = vld [vmem:[#allocation8 + $0x28] sm:$0xf]
    %v420 = vld [vmem:[#allocation8 + $0x2c] sm:$0xf]
    %v421 = vld [vmem:[#allocation8 + $0x30] sm:$0xf]
    %v422 = vld [vmem:[#allocation8 + $0x34] sm:$0xf]
    %v423 = vld [vmem:[#allocation8 + $0x38] sm:$0xf]
    %v424 = vld [vmem:[#allocation8 + $0x3c] sm:$0xf]
    %v441 = vunpack.c.l.b16 %v409
    %v442 = vunpack.c.l.b16 %v410
    %v443 = vunpack.c.l.b16 %v411
    %v444 = vunpack.c.l.b16 %v412
    %v445 = vunpack.c.l.b16 %v413
    %v446 = vunpack.c.l.b16 %v414
    %v447 = vunpack.c.l.b16 %v415
    %v448 = vunpack.c.l.b16 %v416
    %v449 = vunpack.c.l.b16 %v417
    %v450 = vunpack.c.l.b16 %v418
    %v451 = vunpack.c.l.b16 %v419
    %v452 = vunpack.c.l.b16 %v420
    %v453 = vunpack.c.l.b16 %v421
    %v454 = vunpack.c.l.b16 %v422
    %v455 = vunpack.c.l.b16 %v423
    %v456 = vunpack.c.l.b16 %v424
    %v457 = vpack.c.b16 %v442, %v441
    %v458 = vpack.c.b16 %v444, %v443
    %v459 = vpack.c.b16 %v446, %v445
    %v460 = vpack.c.b16 %v448, %v447
    %v461 = vpack.c.b16 %v450, %v449
    %v462 = vpack.c.b16 %v452, %v451
    %v463 = vpack.c.b16 %v454, %v453
    %v464 = vpack.c.b16 %v456, %v455
    %473 = vmatprep.subr.bf16.mxu0 0
    %474 = vmatpush1.bf16.msra.mxu0 %v457
    %475 = vmatprep.subr.bf16.mxu0 0
    %476 = vmatpush1.bf16.msra.mxu0 %v458
    %477 = vmatprep.subr.bf16.mxu0 0
    %478 = vmatpush1.bf16.msra.mxu0 %v459
    %479 = vmatprep.subr.bf16.mxu0 0
    %480 = vmatpush1.bf16.msra.mxu0 %v460
    %481 = vmatprep.subr.bf16.mxu0 0
    %482 = vmatpush1.bf16.msra.mxu0 %v461
    %483 = vmatprep.subr.bf16.mxu0 0
    %484 = vmatpush1.bf16.msra.mxu0 %v462
    %485 = vmatprep.subr.bf16.mxu0 0
    %486 = vmatpush1.bf16.msra.mxu0 %v463
    %487 = vmatprep.subr.bf16.mxu0 0
    %488 = vmatpush1.bf16.msra.mxu0 %v464
    %489 = vmatprep.subr.bf16.mxu0 0
    %490 = vmatpush1.bf16.msra.mxu0 0
    %491 = vmatprep.subr.bf16.mxu0 0
    %492 = vmatpush1.bf16.msra.mxu0 0
    %493 = vmatprep.subr.bf16.mxu0 0
    %494 = vmatpush1.bf16.msra.mxu0 0
    %495 = vmatprep.subr.bf16.mxu0 0
    %496 = vmatpush1.bf16.msra.mxu0 0
    %497 = vmatprep.subr.bf16.mxu0 0
    %498 = vmatpush1.bf16.msra.mxu0 0
    %499 = vmatprep.subr.bf16.mxu0 0
    %500 = vmatpush1.bf16.msra.mxu0 0
    %501 = vmatprep.subr.bf16.mxu0 0
    %502 = vmatpush1.bf16.msra.mxu0 0
    %503 = vmatprep.subr.bf16.mxu0 0
    %504 = vmatpush1.bf16.msra.mxu0 0
    %505 = vmatprep.mubr.bf16.mxu0 0
    %506 = vmatmul.mubr.bf16.gmra.mrb[0].mxu0 %v407
    %v507 = vpop.f32.mrb[0].mxu0
    %v508 = vadd.f32 0.0, %v507
    %v509 = vpop.f32.mrb[0].mxu0
    %v510 = vpop.f32.mrb[0].mxu0
    %v511 = vadd.f32 0.0, %v510
    %v512 = vpop.f32.mrb[0].mxu0
    %513 = vmatprep.mubr.bf16.mxu0 0
    %514 = vmatmul.mubr.bf16.gmra.mrb[0].mxu0 %v408
    %v515 = vpop.f32.mrb[0].mxu0
    %v516 = vadd.f32 0.0, %v515
    %v517 = vpop.f32.mrb[0].mxu0
    %v518 = vpop.f32.mrb[0].mxu0
    %v519 = vadd.f32 0.0, %v518
    %v520 = vpop.f32.mrb[0].mxu0
    %521 = vdwg.mxu0
    %v522 = vpack.c.bf16 %v511, %v508
    %v523 = vpack.c.bf16 %v519, %v516
    %v524 = vadd.bf16 %v522, %v247
    %v525 = vadd.bf16 %v523, %v248
    %v526 = vunpack.c.l.bf16 %v524
    %v527 = vunpack.c.h.bf16 %v524
    %v528 = vunpack.c.l.bf16 %v525
    %v529 = vunpack.c.h.bf16 %v525
    %v530 = vmul.f32 %v526, %v526
    %v531 = vmul.f32 %v527, %v527
    %v532 = vmul.f32 %v528, %v528
    %v533 = vmul.f32 %v529, %v529
    %534 = vadd.xlane.f32.xlu0 %v530
    %v535 = vpop.xlane.xlu0 %534
    %536 = vadd.xlane.f32.xlu0 %v531
    %v537 = vpop.xlane.xlu0 %536
    %538 = vadd.xlane.f32.xlu0 %v532
    %v539 = vpop.xlane.xlu0 %538
    %540 = vadd.xlane.f32.xlu0 %v533
    %v541 = vpop.xlane.xlu0 %540
    %v542 = vmul.f32 %v535, %v265
    %v543 = vmul.f32 %v537, %v265
    %v544 = vmul.f32 %v539, %v265
    %v545 = vmul.f32 %v541, %v265
    %v546 = vadd.f32 %v542, 1e-05
    %v547 = vadd.f32 %v543, 1e-05
    %v548 = vadd.f32 %v544, 1e-05
    %v549 = vadd.f32 %v545, 1e-05
    %v550 = vrsqrt.pop %v546
    %v551 = vrsqrt.pop %v547
    %v552 = vrsqrt.pop %v548
    %v553 = vrsqrt.pop %v549
    %v554 = vld [vmem:[%s7] sm:$0x1]
    %v555 = vunpack.c.l.bf16 %v554
    %v556 = vmul.f32 %v526, %v550
    %v557 = vmul.f32 %v527, %v551
    %v558 = vmul.f32 %v528, %v552
    %v559 = vmul.f32 %v529, %v553
    %v560 = vlaneseq
    %v561 = vshrl.u32 %v560, 7
    %v562 = vsub.s32 0, %v561
    %v563 = vrot.slane %v555, %v562
    %v564 = vmul.f32 %v556, %v563
    %v565 = vmul.f32 %v557, %v563
    %v566 = vmul.f32 %v558, %v563
    %v567 = vmul.f32 %v559, %v563
    %v568 = vpack.c.bf16 %v565, %v564
    %v569 = vpack.c.bf16 %v567, %v566
    %v570 = vld [vmem:[#allocation10] sm:$0xf]
    %v571 = vld [vmem:[#allocation10 + $0x4] sm:$0xf]
    %v572 = vld [vmem:[#allocation10 + $0x8] sm:$0xf]
    %v573 = vld [vmem:[#allocation10 + $0xc] sm:$0xf]
    %v574 = vld [vmem:[#allocation10 + $0x10] sm:$0xf]
    %v575 = vld [vmem:[#allocation10 + $0x14] sm:$0xf]
    %v576 = vld [vmem:[#allocation10 + $0x18] sm:$0xf]
    %v577 = vld [vmem:[#allocation10 + $0x1c] sm:$0xf]
    %v578 = vld [vmem:[#allocation10 + $0x20] sm:$0xf]
    %v579 = vld [vmem:[#allocation10 + $0x24] sm:$0xf]
    %v580 = vld [vmem:[#allocation10 + $0x28] sm:$0xf]
    %v581 = vld [vmem:[#allocation10 + $0x2c] sm:$0xf]
    %v582 = vld [vmem:[#allocation10 + $0x30] sm:$0xf]
    %v583 = vld [vmem:[#allocation10 + $0x34] sm:$0xf]
    %v584 = vld [vmem:[#allocation10 + $0x38] sm:$0xf]
    %v585 = vld [vmem:[#allocation10 + $0x3c] sm:$0xf]
    %v602 = vunpack.c.l.b16 %v570
    %v603 = vunpack.c.l.b16 %v571
    %v604 = vunpack.c.l.b16 %v572
    %v605 = vunpack.c.l.b16 %v573
    %v606 = vunpack.c.l.b16 %v574
    %v607 = vunpack.c.l.b16 %v575
    %v608 = vunpack.c.l.b16 %v576
    %v609 = vunpack.c.l.b16 %v577
    %v610 = vunpack.c.l.b16 %v578
    %v611 = vunpack.c.l.b16 %v579
    %v612 = vunpack.c.l.b16 %v580
    %v613 = vunpack.c.l.b16 %v581
    %v614 = vunpack.c.l.b16 %v582
    %v615 = vunpack.c.l.b16 %v583
    %v616 = vunpack.c.l.b16 %v584
    %v617 = vunpack.c.l.b16 %v585
    %v618 = vpack.c.b16 %v603, %v602
    %v619 = vpack.c.b16 %v605, %v604
    %v620 = vpack.c.b16 %v607, %v606
    %v621 = vpack.c.b16 %v609, %v608
    %v622 = vpack.c.b16 %v611, %v610
    %v623 = vpack.c.b16 %v613, %v612
    %v624 = vpack.c.b16 %v615, %v614
    %v625 = vpack.c.b16 %v617, %v616
    %634 = vmatprep.subr.bf16.mxu0 0
    %635 = vmatpush1.bf16.msra.mxu0 %v618
    %636 = vmatprep.subr.bf16.mxu0 0
    %637 = vmatpush1.bf16.msra.mxu0 %v619
    %638 = vmatprep.subr.bf16.mxu0 0
    %639 = vmatpush1.bf16.msra.mxu0 %v620
    %640 = vmatprep.subr.bf16.mxu0 0
    %641 = vmatpush1.bf16.msra.mxu0 %v621
    %642 = vmatprep.subr.bf16.mxu0 0
    %643 = vmatpush1.bf16.msra.mxu0 %v622
    %644 = vmatprep.subr.bf16.mxu0 0
    %645 = vmatpush1.bf16.msra.mxu0 %v623
    %646 = vmatprep.subr.bf16.mxu0 0
    %647 = vmatpush1.bf16.msra.mxu0 %v624
    %648 = vmatprep.subr.bf16.mxu0 0
    %649 = vmatpush1.bf16.msra.mxu0 %v625
    %650 = vmatprep.subr.bf16.mxu0 0
    %651 = vmatpush1.bf16.msra.mxu0 0
    %652 = vmatprep.subr.bf16.mxu0 0
    %653 = vmatpush1.bf16.msra.mxu0 0
    %654 = vmatprep.subr.bf16.mxu0 0
    %655 = vmatpush1.bf16.msra.mxu0 0
    %656 = vmatprep.subr.bf16.mxu0 0
    %657 = vmatpush1.bf16.msra.mxu0 0
    %658 = vmatprep.subr.bf16.mxu0 0
    %659 = vmatpush1.bf16.msra.mxu0 0
    %660 = vmatprep.subr.bf16.mxu0 0
    %661 = vmatpush1.bf16.msra.mxu0 0
    %662 = vmatprep.subr.bf16.mxu0 0
    %663 = vmatpush1.bf16.msra.mxu0 0
    %664 = vmatprep.subr.bf16.mxu0 0
    %665 = vmatpush1.bf16.msra.mxu0 0
    %666 = vmatprep.mubr.bf16.mxu0 0
    %667 = vmatmul.mubr.bf16.gmra.mrb[0].mxu0 %v568
    %v668 = vpop.f32.mrb[0].mxu0
    %v669 = vadd.f32 0.0, %v668
    %v670 = vpop.f32.mrb[0].mxu0
    %v671 = vpop.f32.mrb[0].mxu0
    %v672 = vadd.f32 0.0, %v671
    %v673 = vpop.f32.mrb[0].mxu0
    %674 = vmatprep.mubr.bf16.mxu0 0
    %675 = vmatmul.mubr.bf16.gmra.mrb[0].mxu0 %v569
    %v676 = vpop.f32.mrb[0].mxu0
    %v677 = vadd.f32 0.0, %v676
    %v678 = vpop.f32.mrb[0].mxu0
    %v679 = vpop.f32.mrb[0].mxu0
    %v680 = vadd.f32 0.0, %v679
    %v681 = vpop.f32.mrb[0].mxu0
    %682 = vdwg.mxu0
    %v683 = vpack.c.bf16 %v672, %v669
    %v684 = vpack.c.bf16 %v680, %v677
    %v685 = vld [vmem:[#allocation11] sm:$0xf]
    %v686 = vld [vmem:[#allocation11 + $0x4] sm:$0xf]
    %v687 = vld [vmem:[#allocation11 + $0x8] sm:$0xf]
    %v688 = vld [vmem:[#allocation11 + $0xc] sm:$0xf]
    %v689 = vld [vmem:[#allocation11 + $0x10] sm:$0xf]
    %v690 = vld [vmem:[#allocation11 + $0x14] sm:$0xf]
    %v691 = vld [vmem:[#allocation11 + $0x18] sm:$0xf]
    %v692 = vld [vmem:[#allocation11 + $0x1c] sm:$0xf]
    %v693 = vld [vmem:[#allocation11 + $0x20] sm:$0xf]
    %v694 = vld [vmem:[#allocation11 + $0x24] sm:$0xf]
    %v695 = vld [vmem:[#allocation11 + $0x28] sm:$0xf]
    %v696 = vld [vmem:[#allocation11 + $0x2c] sm:$0xf]
    %v697 = vld [vmem:[#allocation11 + $0x30] sm:$0xf]
    %v698 = vld [vmem:[#allocation11 + $0x34] sm:$0xf]
    %v699 = vld [vmem:[#allocation11 + $0x38] sm:$0xf]
    %v700 = vld [vmem:[#allocation11 + $0x3c] sm:$0xf]
    %v717 = vunpack.c.l.b16 %v685
    %v718 = vunpack.c.l.b16 %v686
    %v719 = vunpack.c.l.b16 %v687
    %v720 = vunpack.c.l.b16 %v688
    %v721 = vunpack.c.l.b16 %v689
    %v722 = vunpack.c.l.b16 %v690
    %v723 = vunpack.c.l.b16 %v691
    %v724 = vunpack.c.l.b16 %v692
    %v725 = vunpack.c.l.b16 %v693
    %v726 = vunpack.c.l.b16 %v694
    %v727 = vunpack.c.l.b16 %v695
    %v728 = vunpack.c.l.b16 %v696
    %v729 = vunpack.c.l.b16 %v697
    %v730 = vunpack.c.l.b16 %v698
    %v731 = vunpack.c.l.b16 %v699
    %v732 = vunpack.c.l.b16 %v700
    %v733 = vpack.c.b16 %v718, %v717
    %v734 = vpack.c.b16 %v720, %v719
    %v735 = vpack.c.b16 %v722, %v721
    %v736 = vpack.c.b16 %v724, %v723
    %v737 = vpack.c.b16 %v726, %v725
    %v738 = vpack.c.b16 %v728, %v727
    %v739 = vpack.c.b16 %v730, %v729
    %v740 = vpack.c.b16 %v732, %v731
    %749 = vmatprep.subr.bf16.mxu0 0
    %750 = vmatpush1.bf16.msra.mxu0 %v733
    %751 = vmatprep.subr.bf16.mxu0 0
    %752 = vmatpush1.bf16.msra.mxu0 %v734
    %753 = vmatprep.subr.bf16.mxu0 0
    %754 = vmatpush1.bf16.msra.mxu0 %v735
    %755 = vmatprep.subr.bf16.mxu0 0
    %756 = vmatpush1.bf16.msra.mxu0 %v736
    %757 = vmatprep.subr.bf16.mxu0 0
    %758 = vmatpush1.bf16.msra.mxu0 %v737
    %759 = vmatprep.subr.bf16.mxu0 0
    %760 = vmatpush1.bf16.msra.mxu0 %v738
    %761 = vmatprep.subr.bf16.mxu0 0
    %762 = vmatpush1.bf16.msra.mxu0 %v739
    %763 = vmatprep.subr.bf16.mxu0 0
    %764 = vmatpush1.bf16.msra.mxu0 %v740
    %765 = vmatprep.subr.bf16.mxu0 0
    %766 = vmatpush1.bf16.msra.mxu0 0
    %767 = vmatprep.subr.bf16.mxu0 0
    %768 = vmatpush1.bf16.msra.mxu0 0
    %769 = vmatprep.subr.bf16.mxu0 0
    %770 = vmatpush1.bf16.msra.mxu0 0
    %771 = vmatprep.subr.bf16.mxu0 0
    %772 = vmatpush1.bf16.msra.mxu0 0
    %773 = vmatprep.subr.bf16.mxu0 0
    %774 = vmatpush1.bf16.msra.mxu0 0
    %775 = vmatprep.subr.bf16.mxu0 0
    %776 = vmatpush1.bf16.msra.mxu0 0
    %777 = vmatprep.subr.bf16.mxu0 0
    %778 = vmatpush1.bf16.msra.mxu0 0
    %779 = vmatprep.subr.bf16.mxu0 0
    %780 = vmatpush1.bf16.msra.mxu0 0
    %781 = vmatprep.mubr.bf16.mxu0 0
    %782 = vmatmul.mubr.bf16.gmra.mrb[0].mxu0 %v683
    %v783 = vpop.f32.mrb[0].mxu0
    %v784 = vadd.f32 0.0, %v783
    %v785 = vpop.f32.mrb[0].mxu0
    %v786 = vpop.f32.mrb[0].mxu0
    %v787 = vadd.f32 0.0, %v786
    %v788 = vpop.f32.mrb[0].mxu0
    %789 = vmatprep.mubr.bf16.mxu0 0
    %790 = vmatmul.mubr.bf16.gmra.mrb[0].mxu0 %v684
    %v791 = vpop.f32.mrb[0].mxu0
    %v792 = vadd.f32 0.0, %v791
    %v793 = vpop.f32.mrb[0].mxu0
    %v794 = vpop.f32.mrb[0].mxu0
    %v795 = vadd.f32 0.0, %v794
    %v796 = vpop.f32.mrb[0].mxu0
    %797 = vdwg.mxu0
    %v798 = vpack.c.bf16 %v787, %v784
    %v799 = vpack.c.bf16 %v795, %v792
    %v800 = vadd.bf16 %v798, %v524
    %v801 = vadd.bf16 %v799, %v525
    %v802 = vunpack.c.l.bf16 %v800
    %v803 = vunpack.c.h.bf16 %v800
    %v804 = vunpack.c.l.bf16 %v801
    %v805 = vunpack.c.h.bf16 %v801
    %v806 = vmul.f32 %v802, %v802
    %v807 = vmul.f32 %v803, %v803
    %v808 = vmul.f32 %v804, %v804
    %v809 = vmul.f32 %v805, %v805
    %810 = vadd.xlane.f32.xlu0 %v806
    %v811 = vpop.xlane.xlu0 %810
    %812 = vadd.xlane.f32.xlu0 %v807
    %v813 = vpop.xlane.xlu0 %812
    %814 = vadd.xlane.f32.xlu0 %v808
    %v815 = vpop.xlane.xlu0 %814
    %816 = vadd.xlane.f32.xlu0 %v809
    %v817 = vpop.xlane.xlu0 %816
    %v818 = vmul.f32 %v811, %v265
    %v819 = vmul.f32 %v813, %v265
    %v820 = vmul.f32 %v815, %v265
    %v821 = vmul.f32 %v817, %v265
    %v822 = vadd.f32 %v818, 1e-05
    %v823 = vadd.f32 %v819, 1e-05
    %v824 = vadd.f32 %v820, 1e-05
    %v825 = vadd.f32 %v821, 1e-05
    %v826 = vrsqrt.pop %v822
    %v827 = vrsqrt.pop %v823
    %v828 = vrsqrt.pop %v824
    %v829 = vrsqrt.pop %v825
    %v830 = vld [vmem:[%s8] sm:$0x1]
    %v831 = vunpack.c.l.bf16 %v830
    %v832 = vmul.f32 %v802, %v826
    %v833 = vmul.f32 %v803, %v827
    %v834 = vmul.f32 %v804, %v828
    %v835 = vmul.f32 %v805, %v829
    %v836 = vlaneseq
    %v837 = vshrl.u32 %v836, 7
    %v838 = vsub.s32 0, %v837
    %v839 = vrot.slane %v831, %v838
    %v840 = vmul.f32 %v832, %v839
    %v841 = vmul.f32 %v833, %v839
    %v842 = vmul.f32 %v834, %v839
    %v843 = vmul.f32 %v835, %v839
    %v844 = vpack.c.bf16 %v841, %v840
    %v845 = vpack.c.bf16 %v843, %v842
    %v848 = vunpack.c.l.b16 %v844
    %v849 = vunpack.c.h.b16 %v844
    %v850 = vunpack.c.l.b16 %v845
    %v851 = vunpack.c.h.b16 %v845
    %v852 = vpack.c.b16 %v848, %v848
    %v853 = vpack.c.b16 %v849, %v849
    %v854 = vpack.c.b16 %v850, %v850
    %v855 = vpack.c.b16 %v851, %v851
    %860 = vst [vmem:[#allocation13] sm:$0xf] %v852
    %861 = vst [vmem:[#allocation13 + $0x4] sm:$0xf] %v853
    %862 = vst [vmem:[#allocation13 + $0x8] sm:$0xf] %v854
    %863 = vst [vmem:[#allocation13 + $0xc] sm:$0xf] %v855
    // Predicated region
    $region62: #{tpu_custom_call.1} parent=1 // pred_check
      _
    $region63: #{tpu_custom_call.1} parent=1 // pred_check_branch
      %865 = sbr.rel (0) target = $region65
    $region64: #{tpu_custom_call.1} parent=1 // pred_region
      %s867 = ssub.s32 256, 256
      %868 = vsyncadd [#allocation4], %s867
      %s869 = sshll.u32 [#allocation13], 4
      %s870 = int_to_ptr.vmem [resolvable:$true] %s869
      %875 = dma.vmem_to_hbm [thread:$0]  %s870, 256, %s9, [#allocation4], 64, 64, 4
    $region65: #{tpu_custom_call.1} parent=1 // pred_fallthru
      _
    // Predicated region
    $region66: #{tpu_custom_call.1} parent=1 // pred_check
      _
    $region67: #{tpu_custom_call.1} parent=1 // pred_check_branch
      %877 = sbr.rel (0) target = $region69
    $region68: #{tpu_custom_call.1} parent=1 // pred_region
      %878 = dma.done [#allocation4], 256
    $region69: #{tpu_custom_call.1} parent=1 // pred_fallthru
      _
    %879 = vsyncpa [#allocation3], 1
    %880 = vsyncpa [#allocation6], 1
    %881 = vsyncpa [#allocation9], 1
    %882 = vsyncpa [#allocation12], 1
    %883 = vsyncpa [#allocation4], 1

</llo_original>
